<compile_context>
chip_gen: v5e
topology: v5e:2x2
jax: 0.10.0
libtpu: 0.0.40
codegen_flags: <defaults>
</compile_context>

<pallas_src>
import jax
import jax.numpy as jnp
import numpy as np
from jax.experimental import pallas as pl
from jax.experimental.pallas import tpu as pltpu


# ----------------------------------------------------------------------------
# Fused policy-head kernel: 1x1 conv (BN-folded) + relu + Linear + softmax
# ----------------------------------------------------------------------------
def _policy_head_kernel(x_ref, wc_ref, shift_ref, wf_ref, bf_ref, out_ref, y_ref):
    # x_ref:     (TB, C, HW)    f32  batch tile (channels in sublanes, HW in lanes)
    # wc_ref:    (F, C)         bf16 conv weight with BN scale folded in
    # shift_ref: (F, 1)         f32  folded BN shift (includes conv bias)
    # wf_ref:    (F, HW, Npad)  bf16 fc weight, rows grouped by conv channel (PyTorch order)
    # bf_ref:    (1, Npad)      f32  fc bias; padded lanes are -1e30
    # out_ref:   (TB, Npad)     f32  softmax probabilities (padded lanes -> 0)
    # y_ref:     (F, TB, HW)    f32  VMEM scratch: relu(conv) regrouped per conv channel
    TB = x_ref.shape[0]
    F = wc_ref.shape[0]

    wc = wc_ref[...]          # hoisted loop-invariant loads
    shift = shift_ref[...]

    # --- 1x1 conv (BN folded) + shift + relu: one small MXU matmul per batch element ---
    for b in range(TB):                                   # static unroll, TB == 8
        xb = x_ref[b].astype(jnp.bfloat16)                 # (C, HW)
        y = jnp.dot(wc, xb, preferred_element_type=jnp.float32)   # (F, HW) f32 acc
        y = jnp.maximum(y + shift, 0.0)                    # BN shift + relu
        for f in range(F):                                 # regroup -> (F, TB, HW)
            y_ref[f, b:b + 1, :] = y[f:f + 1, :]

    # --- FC decomposed per conv channel: F MXU matmuls of (TB,HW)@(HW,Npad) ---
    logits = jnp.dot(y_ref[0].astype(jnp.bfloat16), wf_ref[0],
                     preferred_element_type=jnp.float32)            # (TB, Npad)
    for f in range(1, F):
        logits = logits + jnp.dot(y_ref[f].astype(jnp.bfloat16), wf_ref[f],
                                  preferred_element_type=jnp.float32)
    logits = logits + bf_ref[...]                          # bias broadcasts over batch rows

    # --- batched numerically-stable softmax; padded lanes hold -1e30 -> exp == 0 ---
    m = jnp.max(logits, axis=-1, keepdims=True)
    e = jnp.exp(logits - m)
    denom = jnp.sum(e, axis=-1, keepdims=True)
    out_ref[...] = e * pl.reciprocal(denom, approx=True)


def policy_head_forward(params, x_nchw, *, eps=1e-5, batch_tile=8):
    """PolicyHead.forward: x (B, res_filters, H, W) -> probabilities (B, H*W + 1).

    batch_tile must be a multiple of 8 (sublane granularity of the output block).
    """
    x = x_nchw.astype(jnp.float32)
    B, C, H, W = x.shape
    HW = H * W

    wc = params["conv_w"]                       # (F, C)  from Conv2d weight (F, C, 1, 1)
    F = wc.shape[0]
    wf_t = params["fc_w"].T                     # (F*HW, n_out): row index = f*HW + hw
    n_out = wf_t.shape[1]
    n_pad = ((n_out + 127) // 128) * 128        # lane-dense output width

    # ---- trace-time parameter folding (tiny XLA ops; free under jit) ----------------
    scale = params["bn_gamma"] / jnp.sqrt(params["bn_var"] + eps)                 # (F,)
    wc_s = (wc * scale[:, None]).astype(jnp.bfloat16)                             # (F, C)
    shift = (params["bn_beta"] + (params["conv_b"] - params["bn_mean"]) * scale)  # (F,)
    shift = shift[:, None].astype(jnp.float32)                                    # (F, 1)

    wf3 = jnp.pad(wf_t, ((0, 0), (0, n_pad - n_out)))                             # (F*HW, Npad)
    wf3 = wf3.reshape(F, HW, n_pad).astype(jnp.bfloat16)                          # (F, HW, Npad)
    bf_p = jnp.pad(params["fc_b"][None, :], ((0, 0), (0, n_pad - n_out)),
                   constant_values=-1e30).astype(jnp.float32)                     # (1, Npad)

    # ---- activation layout: NCHW -> (B, C, HW) is a free contiguous reshape ---------
    TB = batch_tile
    B_pad = ((B + TB - 1) // TB) * TB
    x3 = x.reshape(B, C, HW)
    if B_pad != B:
        x3 = jnp.pad(x3, ((0, B_pad - B), (0, 0), (0, 0)))   # padded rows sliced off below

    out = pl.pallas_call(
        _policy_head_kernel,
        out_shape=jax.ShapeDtypeStruct((B_pad, n_pad), jnp.float32),
        grid=(B_pad // TB,),
        in_specs=[
            pl.BlockSpec((TB, C, HW), lambda i: (i, 0, 0)),
            pl.BlockSpec((F, C), lambda i: (0, 0)),
            pl.BlockSpec((F, 1), lambda i: (0, 0)),
            pl.BlockSpec((F, HW, n_pad), lambda i: (0, 0, 0)),
            pl.BlockSpec((1, n_pad), lambda i: (0, 0)),
        ],
        out_specs=pl.BlockSpec((TB, n_pad), lambda i: (i, 0)),
        scratch_shapes=[pltpu.VMEM((F, TB, HW), jnp.float32)],
        compiler_params=pltpu.CompilerParams(dimension_semantics=("parallel",)),
    )(x3, wc_s, shift, wf3, bf_p)

    return out[:B, :n_out]


# ----------------------------------------------------------------------------
# Pure-JAX reference (mirrors the PyTorch module, eval-mode BN, f32 everywhere)
# ----------------------------------------------------------------------------
def policy_head_reference(params, x_nchw, *, eps=1e-5):
    x = x_nchw.astype(jnp.float32)
    B = x.shape[0]
    y = jnp.einsum("bchw,fc->bfhw", x, params["conv_w"]) + params["conv_b"][None, :, None, None]
    scale = params["bn_gamma"] / jnp.sqrt(params["bn_var"] + eps)
    y = (y - params["bn_mean"][None, :, None, None]) * scale[None, :, None, None] \
        + params["bn_beta"][None, :, None, None]
    y = jnp.maximum(y, 0.0)
    flat = y.reshape(B, -1)                               # PyTorch .view(B, -1): f*HW + hw
    logits = flat @ params["fc_w"].T + params["fc_b"]
    return jax.nn.softmax(logits, axis=1)


# ----------------------------------------------------------------------------
# Deterministic parameter initialization
# ----------------------------------------------------------------------------
def init_policy_head_params(key, board_size=13, res_filters=256, filters=2):
    hw = board_size * board_size
    n_out = hw + 1
    ks = jax.random.split(key, 8)
    return dict(
        conv_w=0.05 * jax.random.normal(ks[0], (filters, res_filters), jnp.float32),
        conv_b=0.05 * jax.random.normal(ks[1], (filters,), jnp.float32),
        bn_gamma=1.0 + 0.1 * jax.random.normal(ks[2], (filters,), jnp.float32),
        bn_beta=0.1 * jax.random.normal(ks[3], (filters,), jnp.float32),
        bn_mean=0.05 * jax.random.normal(ks[4], (filters,), jnp.float32),
        bn_var=1.0 + 0.1 * jax.random.uniform(ks[5], (filters,), jnp.float32),
        # PyTorch nn.Linear.weight layout: (out_features, in_features)
        fc_w=0.05 * jax.random.normal(ks[6], (n_out, filters * hw), jnp.float32),
        fc_b=0.05 * jax.random.normal(ks[7], (n_out,), jnp.float32),
    )


if __name__ == "__main__":
    board_size = 13      # PolicyHead defaults
    res_filters = 256
    filters = 2
    batch = 4

    root = jax.random.PRNGKey(0)
    kx, kp = jax.random.split(root)
    params = init_policy_head_params(kp, board_size, res_filters, filters)
    x = jax.random.normal(kx, (batch, res_filters, board_size, board_size), jnp.float32)

    fwd = jax.jit(policy_head_forward)
    probs = fwd(params, x)
    jax.block_until_ready(probs)

    n_out = board_size * board_size + 1
    assert probs.shape == (batch, n_out)

    ref = policy_head_reference(params, x)
    np.testing.assert_allclose(np.asarray(probs), np.asarray(ref), atol=5e-3, rtol=0)
    assert np.allclose(np.asarray(probs).sum(axis=1), 1.0, atol=1e-2)

    print("KERNEL_OK")
</pallas_src>

<mosaic_0001>
module attributes {stable_mosaic.version = 11 : i64} {
  func.func @_policy_head_kernel(%arg0: i32, %arg1: memref<8x256x169xf32, #tpu.memory_space<vmem>>, %arg2: memref<2x256xbf16, #tpu.memory_space<vmem>>, %arg3: memref<2x1xf32, #tpu.memory_space<vmem>>, %arg4: memref<2x169x256xbf16, #tpu.memory_space<vmem>>, %arg5: memref<1x256xf32, #tpu.memory_space<vmem>>, %arg6: memref<8x256xf32, #tpu.memory_space<vmem>>, %arg7: memref<2x8x169xf32, #tpu.memory_space<vmem>>) attributes {dimension_semantics = [#tpu.dimension_semantics<parallel>], iteration_bounds = array<i64: 1>, scalar_prefetch = 0 : i64, scratch_operands = 1 : i64, tpu.core_type = #tpu.core_type<tc>, window_params = [{transform_indices = @transform_0, window_bounds = array<i64: 8, 256, 169>}, {pipeline_mode = #tpu.pipeline_mode<synchronous>, transform_indices = @transform_1, window_bounds = array<i64: 2, 256>}, {pipeline_mode = #tpu.pipeline_mode<synchronous>, transform_indices = @transform_2, window_bounds = array<i64: 2, 1>}, {pipeline_mode = #tpu.pipeline_mode<synchronous>, transform_indices = @transform_3, window_bounds = array<i64: 2, 169, 256>}, {pipeline_mode = #tpu.pipeline_mode<synchronous>, transform_indices = @transform_4, window_bounds = array<i64: 1, 256>}, {transform_indices = @transform_5, window_bounds = array<i64: 8, 256>}]} {
    %c0 = arith.constant 0 : index
    %c0_0 = arith.constant 0 : index
    %0 = vector.load %arg2[%c0, %c0_0] : memref<2x256xbf16, #tpu.memory_space<vmem>>, vector<2x256xbf16>
    %c0_1 = arith.constant 0 : index
    %c0_2 = arith.constant 0 : index
    %1 = vector.load %arg3[%c0_1, %c0_2] : memref<2x1xf32, #tpu.memory_space<vmem>>, vector<2x1xf32>
    %c0_3 = arith.constant 0 : index
    %c0_4 = arith.constant 0 : index
    %c0_5 = arith.constant 0 : index
    %2 = vector.load %arg1[%c0_3, %c0_4, %c0_5] : memref<8x256x169xf32, #tpu.memory_space<vmem>>, vector<1x256x169xf32>
    %3 = vector.shape_cast %2 : vector<1x256x169xf32> to vector<256x169xf32>
    %4 = arith.truncf %3 : vector<256x169xf32> to vector<256x169xbf16>
    %cst = arith.constant dense<0.000000e+00> : vector<2x169xf32>
    %5 = tpu.matmul %0, %4, %cst {dimension_numbers = #tpu.dot_dimension_numbers<[1], [0], [0], [1], [0, 0, 1, 1], [], []>} : vector<2x256xbf16>, vector<256x169xbf16>, vector<2x169xf32> -> vector<2x169xf32>
    %6 = vector.broadcast %1 : vector<2x1xf32> to vector<2x169xf32>
    %7 = arith.addf %5, %6 : vector<2x169xf32>
    %cst_6 = arith.constant 0.000000e+00 : f32
    %8 = vector.broadcast %cst_6 : f32 to vector<2x169xf32>
    %9 = arith.maximumf %7, %8 : vector<2x169xf32>
    %10 = vector.extract_strided_slice %9 {offsets = [0, 0], sizes = [1, 169], strides = [1, 1]} : vector<2x169xf32> to vector<1x169xf32>
    %c0_7 = arith.constant 0 : index
    %c0_8 = arith.constant 0 : index
    %c0_9 = arith.constant 0 : index
    %11 = vector.load %arg7[%c0_7, %c0_8, %c0_9] : memref<2x8x169xf32, #tpu.memory_space<vmem>>, vector<1x1x169xf32>
    %12 = vector.shape_cast %11 : vector<1x1x169xf32> to vector<1x169xf32>
    %13 = vector.shape_cast %10 : vector<1x169xf32> to vector<1x1x169xf32>
    tpu.vector_store %arg7[%c0_7, %c0_8, %c0_9], %13 {strides = array<i32>} : memref<2x8x169xf32, #tpu.memory_space<vmem>>, vector<1x1x169xf32>,
    %14 = vector.extract_strided_slice %9 {offsets = [1, 0], sizes = [1, 169], strides = [1, 1]} : vector<2x169xf32> to vector<1x169xf32>
    %c1 = arith.constant 1 : index
    %c0_10 = arith.constant 0 : index
    %c0_11 = arith.constant 0 : index
    %15 = vector.load %arg7[%c1, %c0_10, %c0_11] : memref<2x8x169xf32, #tpu.memory_space<vmem>>, vector<1x1x169xf32>
    %16 = vector.shape_cast %15 : vector<1x1x169xf32> to vector<1x169xf32>
    %17 = vector.shape_cast %14 : vector<1x169xf32> to vector<1x1x169xf32>
    tpu.vector_store %arg7[%c1, %c0_10, %c0_11], %17 {strides = array<i32>} : memref<2x8x169xf32, #tpu.memory_space<vmem>>, vector<1x1x169xf32>,
    %c1_12 = arith.constant 1 : index
    %c0_13 = arith.constant 0 : index
    %c0_14 = arith.constant 0 : index
    %18 = vector.load %arg1[%c1_12, %c0_13, %c0_14] : memref<8x256x169xf32, #tpu.memory_space<vmem>>, vector<1x256x169xf32>
    %19 = vector.shape_cast %18 : vector<1x256x169xf32> to vector<256x169xf32>
    %20 = arith.truncf %19 : vector<256x169xf32> to vector<256x169xbf16>
    %cst_15 = arith.constant dense<0.000000e+00> : vector<2x169xf32>
    %21 = tpu.matmul %0, %20, %cst_15 {dimension_numbers = #tpu.dot_dimension_numbers<[1], [0], [0], [1], [0, 0, 1, 1], [], []>} : vector<2x256xbf16>, vector<256x169xbf16>, vector<2x169xf32> -> vector<2x169xf32>
    %22 = vector.broadcast %1 : vector<2x1xf32> to vector<2x169xf32>
    %23 = arith.addf %21, %22 : vector<2x169xf32>
    %cst_16 = arith.constant 0.000000e+00 : f32
    %24 = vector.broadcast %cst_16 : f32 to vector<2x169xf32>
    %25 = arith.maximumf %23, %24 : vector<2x169xf32>
    %26 = vector.extract_strided_slice %25 {offsets = [0, 0], sizes = [1, 169], strides = [1, 1]} : vector<2x169xf32> to vector<1x169xf32>
    %c0_17 = arith.constant 0 : index
    %c1_18 = arith.constant 1 : index
    %c0_19 = arith.constant 0 : index
    %27 = vector.load %arg7[%c0_17, %c1_18, %c0_19] : memref<2x8x169xf32, #tpu.memory_space<vmem>>, vector<1x1x169xf32>
    %28 = vector.shape_cast %27 : vector<1x1x169xf32> to vector<1x169xf32>
    %29 = vector.shape_cast %26 : vector<1x169xf32> to vector<1x1x169xf32>
    tpu.vector_store %arg7[%c0_17, %c1_18, %c0_19], %29 {strides = array<i32>} : memref<2x8x169xf32, #tpu.memory_space<vmem>>, vector<1x1x169xf32>,
    %30 = vector.extract_strided_slice %25 {offsets = [1, 0], sizes = [1, 169], strides = [1, 1]} : vector<2x169xf32> to vector<1x169xf32>
    %c1_20 = arith.constant 1 : index
    %c1_21 = arith.constant 1 : index
    %c0_22 = arith.constant 0 : index
    %31 = vector.load %arg7[%c1_20, %c1_21, %c0_22] : memref<2x8x169xf32, #tpu.memory_space<vmem>>, vector<1x1x169xf32>
    %32 = vector.shape_cast %31 : vector<1x1x169xf32> to vector<1x169xf32>
    %33 = vector.shape_cast %30 : vector<1x169xf32> to vector<1x1x169xf32>
    tpu.vector_store %arg7[%c1_20, %c1_21, %c0_22], %33 {strides = array<i32>} : memref<2x8x169xf32, #tpu.memory_space<vmem>>, vector<1x1x169xf32>,
    %c2 = arith.constant 2 : index
    %c0_23 = arith.constant 0 : index
    %c0_24 = arith.constant 0 : index
    %34 = vector.load %arg1[%c2, %c0_23, %c0_24] : memref<8x256x169xf32, #tpu.memory_space<vmem>>, vector<1x256x169xf32>
    %35 = vector.shape_cast %34 : vector<1x256x169xf32> to vector<256x169xf32>
    %36 = arith.truncf %35 : vector<256x169xf32> to vector<256x169xbf16>
    %cst_25 = arith.constant dense<0.000000e+00> : vector<2x169xf32>
    %37 = tpu.matmul %0, %36, %cst_25 {dimension_numbers = #tpu.dot_dimension_numbers<[1], [0], [0], [1], [0, 0, 1, 1], [], []>} : vector<2x256xbf16>, vector<256x169xbf16>, vector<2x169xf32> -> vector<2x169xf32>
    %38 = vector.broadcast %1 : vector<2x1xf32> to vector<2x169xf32>
    %39 = arith.addf %37, %38 : vector<2x169xf32>
    %cst_26 = arith.constant 0.000000e+00 : f32
    %40 = vector.broadcast %cst_26 : f32 to vector<2x169xf32>
    %41 = arith.maximumf %39, %40 : vector<2x169xf32>
    %42 = vector.extract_strided_slice %41 {offsets = [0, 0], sizes = [1, 169], strides = [1, 1]} : vector<2x169xf32> to vector<1x169xf32>
    %c0_27 = arith.constant 0 : index
    %c2_28 = arith.constant 2 : index
    %c0_29 = arith.constant 0 : index
    %43 = vector.load %arg7[%c0_27, %c2_28, %c0_29] : memref<2x8x169xf32, #tpu.memory_space<vmem>>, vector<1x1x169xf32>
    %44 = vector.shape_cast %43 : vector<1x1x169xf32> to vector<1x169xf32>
    %45 = vector.shape_cast %42 : vector<1x169xf32> to vector<1x1x169xf32>
    tpu.vector_store %arg7[%c0_27, %c2_28, %c0_29], %45 {strides = array<i32>} : memref<2x8x169xf32, #tpu.memory_space<vmem>>, vector<1x1x169xf32>,
    %46 = vector.extract_strided_slice %41 {offsets = [1, 0], sizes = [1, 169], strides = [1, 1]} : vector<2x169xf32> to vector<1x169xf32>
    %c1_30 = arith.constant 1 : index
    %c2_31 = arith.constant 2 : index
    %c0_32 = arith.constant 0 : index
    %47 = vector.load %arg7[%c1_30, %c2_31, %c0_32] : memref<2x8x169xf32, #tpu.memory_space<vmem>>, vector<1x1x169xf32>
    %48 = vector.shape_cast %47 : vector<1x1x169xf32> to vector<1x169xf32>
    %49 = vector.shape_cast %46 : vector<1x169xf32> to vector<1x1x169xf32>
    tpu.vector_store %arg7[%c1_30, %c2_31, %c0_32], %49 {strides = array<i32>} : memref<2x8x169xf32, #tpu.memory_space<vmem>>, vector<1x1x169xf32>,
    %c3 = arith.constant 3 : index
    %c0_33 = arith.constant 0 : index
    %c0_34 = arith.constant 0 : index
    %50 = vector.load %arg1[%c3, %c0_33, %c0_34] : memref<8x256x169xf32, #tpu.memory_space<vmem>>, vector<1x256x169xf32>
    %51 = vector.shape_cast %50 : vector<1x256x169xf32> to vector<256x169xf32>
    %52 = arith.truncf %51 : vector<256x169xf32> to vector<256x169xbf16>
    %cst_35 = arith.constant dense<0.000000e+00> : vector<2x169xf32>
    %53 = tpu.matmul %0, %52, %cst_35 {dimension_numbers = #tpu.dot_dimension_numbers<[1], [0], [0], [1], [0, 0, 1, 1], [], []>} : vector<2x256xbf16>, vector<256x169xbf16>, vector<2x169xf32> -> vector<2x169xf32>
    %54 = vector.broadcast %1 : vector<2x1xf32> to vector<2x169xf32>
    %55 = arith.addf %53, %54 : vector<2x169xf32>
    %cst_36 = arith.constant 0.000000e+00 : f32
    %56 = vector.broadcast %cst_36 : f32 to vector<2x169xf32>
    %57 = arith.maximumf %55, %56 : vector<2x169xf32>
    %58 = vector.extract_strided_slice %57 {offsets = [0, 0], sizes = [1, 169], strides = [1, 1]} : vector<2x169xf32> to vector<1x169xf32>
    %c0_37 = arith.constant 0 : index
    %c3_38 = arith.constant 3 : index
    %c0_39 = arith.constant 0 : index
    %59 = vector.load %arg7[%c0_37, %c3_38, %c0_39] : memref<2x8x169xf32, #tpu.memory_space<vmem>>, vector<1x1x169xf32>
    %60 = vector.shape_cast %59 : vector<1x1x169xf32> to vector<1x169xf32>
    %61 = vector.shape_cast %58 : vector<1x169xf32> to vector<1x1x169xf32>
    tpu.vector_store %arg7[%c0_37, %c3_38, %c0_39], %61 {strides = array<i32>} : memref<2x8x169xf32, #tpu.memory_space<vmem>>, vector<1x1x169xf32>,
    %62 = vector.extract_strided_slice %57 {offsets = [1, 0], sizes = [1, 169], strides = [1, 1]} : vector<2x169xf32> to vector<1x169xf32>
    %c1_40 = arith.constant 1 : index
    %c3_41 = arith.constant 3 : index
    %c0_42 = arith.constant 0 : index
    %63 = vector.load %arg7[%c1_40, %c3_41, %c0_42] : memref<2x8x169xf32, #tpu.memory_space<vmem>>, vector<1x1x169xf32>
    %64 = vector.shape_cast %63 : vector<1x1x169xf32> to vector<1x169xf32>
    %65 = vector.shape_cast %62 : vector<1x169xf32> to vector<1x1x169xf32>
    tpu.vector_store %arg7[%c1_40, %c3_41, %c0_42], %65 {strides = array<i32>} : memref<2x8x169xf32, #tpu.memory_space<vmem>>, vector<1x1x169xf32>,
    %c4 = arith.constant 4 : index
    %c0_43 = arith.constant 0 : index
    %c0_44 = arith.constant 0 : index
    %66 = vector.load %arg1[%c4, %c0_43, %c0_44] : memref<8x256x169xf32, #tpu.memory_space<vmem>>, vector<1x256x169xf32>
    %67 = vector.shape_cast %66 : vector<1x256x169xf32> to vector<256x169xf32>
    %68 = arith.truncf %67 : vector<256x169xf32> to vector<256x169xbf16>
    %cst_45 = arith.constant dense<0.000000e+00> : vector<2x169xf32>
    %69 = tpu.matmul %0, %68, %cst_45 {dimension_numbers = #tpu.dot_dimension_numbers<[1], [0], [0], [1], [0, 0, 1, 1], [], []>} : vector<2x256xbf16>, vector<256x169xbf16>, vector<2x169xf32> -> vector<2x169xf32>
    %70 = vector.broadcast %1 : vector<2x1xf32> to vector<2x169xf32>
    %71 = arith.addf %69, %70 : vector<2x169xf32>
    %cst_46 = arith.constant 0.000000e+00 : f32
    %72 = vector.broadcast %cst_46 : f32 to vector<2x169xf32>
    %73 = arith.maximumf %71, %72 : vector<2x169xf32>
    %74 = vector.extract_strided_slice %73 {offsets = [0, 0], sizes = [1, 169], strides = [1, 1]} : vector<2x169xf32> to vector<1x169xf32>
    %c0_47 = arith.constant 0 : index
    %c4_48 = arith.constant 4 : index
    %c0_49 = arith.constant 0 : index
    %75 = vector.load %arg7[%c0_47, %c4_48, %c0_49] : memref<2x8x169xf32, #tpu.memory_space<vmem>>, vector<1x1x169xf32>
    %76 = vector.shape_cast %75 : vector<1x1x169xf32> to vector<1x169xf32>
    %77 = vector.shape_cast %74 : vector<1x169xf32> to vector<1x1x169xf32>
    tpu.vector_store %arg7[%c0_47, %c4_48, %c0_49], %77 {strides = array<i32>} : memref<2x8x169xf32, #tpu.memory_space<vmem>>, vector<1x1x169xf32>,
    %78 = vector.extract_strided_slice %73 {offsets = [1, 0], sizes = [1, 169], strides = [1, 1]} : vector<2x169xf32> to vector<1x169xf32>
    %c1_50 = arith.constant 1 : index
    %c4_51 = arith.constant 4 : index
    %c0_52 = arith.constant 0 : index
    %79 = vector.load %arg7[%c1_50, %c4_51, %c0_52] : memref<2x8x169xf32, #tpu.memory_space<vmem>>, vector<1x1x169xf32>
    %80 = vector.shape_cast %79 : vector<1x1x169xf32> to vector<1x169xf32>
    %81 = vector.shape_cast %78 : vector<1x169xf32> to vector<1x1x169xf32>
    tpu.vector_store %arg7[%c1_50, %c4_51, %c0_52], %81 {strides = array<i32>} : memref<2x8x169xf32, #tpu.memory_space<vmem>>, vector<1x1x169xf32>,
    %c5 = arith.constant 5 : index
    %c0_53 = arith.constant 0 : index
    %c0_54 = arith.constant 0 : index
    %82 = vector.load %arg1[%c5, %c0_53, %c0_54] : memref<8x256x169xf32, #tpu.memory_space<vmem>>, vector<1x256x169xf32>
    %83 = vector.shape_cast %82 : vector<1x256x169xf32> to vector<256x169xf32>
    %84 = arith.truncf %83 : vector<256x169xf32> to vector<256x169xbf16>
    %cst_55 = arith.constant dense<0.000000e+00> : vector<2x169xf32>
    %85 = tpu.matmul %0, %84, %cst_55 {dimension_numbers = #tpu.dot_dimension_numbers<[1], [0], [0], [1], [0, 0, 1, 1], [], []>} : vector<2x256xbf16>, vector<256x169xbf16>, vector<2x169xf32> -> vector<2x169xf32>
    %86 = vector.broadcast %1 : vector<2x1xf32> to vector<2x169xf32>
    %87 = arith.addf %85, %86 : vector<2x169xf32>
    %cst_56 = arith.constant 0.000000e+00 : f32
    %88 = vector.broadcast %cst_56 : f32 to vector<2x169xf32>
    %89 = arith.maximumf %87, %88 : vector<2x169xf32>
    %90 = vector.extract_strided_slice %89 {offsets = [0, 0], sizes = [1, 169], strides = [1, 1]} : vector<2x169xf32> to vector<1x169xf32>
    %c0_57 = arith.constant 0 : index
    %c5_58 = arith.constant 5 : index
    %c0_59 = arith.constant 0 : index
    %91 = vector.load %arg7[%c0_57, %c5_58, %c0_59] : memref<2x8x169xf32, #tpu.memory_space<vmem>>, vector<1x1x169xf32>
    %92 = vector.shape_cast %91 : vector<1x1x169xf32> to vector<1x169xf32>
    %93 = vector.shape_cast %90 : vector<1x169xf32> to vector<1x1x169xf32>
    tpu.vector_store %arg7[%c0_57, %c5_58, %c0_59], %93 {strides = array<i32>} : memref<2x8x169xf32, #tpu.memory_space<vmem>>, vector<1x1x169xf32>,
    %94 = vector.extract_strided_slice %89 {offsets = [1, 0], sizes = [1, 169], strides = [1, 1]} : vector<2x169xf32> to vector<1x169xf32>
    %c1_60 = arith.constant 1 : index
    %c5_61 = arith.constant 5 : index
    %c0_62 = arith.constant 0 : index
    %95 = vector.load %arg7[%c1_60, %c5_61, %c0_62] : memref<2x8x169xf32, #tpu.memory_space<vmem>>, vector<1x1x169xf32>
    %96 = vector.shape_cast %95 : vector<1x1x169xf32> to vector<1x169xf32>
    %97 = vector.shape_cast %94 : vector<1x169xf32> to vector<1x1x169xf32>
    tpu.vector_store %arg7[%c1_60, %c5_61, %c0_62], %97 {strides = array<i32>} : memref<2x8x169xf32, #tpu.memory_space<vmem>>, vector<1x1x169xf32>,
    %c6 = arith.constant 6 : index
    %c0_63 = arith.constant 0 : index
    %c0_64 = arith.constant 0 : index
    %98 = vector.load %arg1[%c6, %c0_63, %c0_64] : memref<8x256x169xf32, #tpu.memory_space<vmem>>, vector<1x256x169xf32>
    %99 = vector.shape_cast %98 : vector<1x256x169xf32> to vector<256x169xf32>
    %100 = arith.truncf %99 : vector<256x169xf32> to vector<256x169xbf16>
    %cst_65 = arith.constant dense<0.000000e+00> : vector<2x169xf32>
    %101 = tpu.matmul %0, %100, %cst_65 {dimension_numbers = #tpu.dot_dimension_numbers<[1], [0], [0], [1], [0, 0, 1, 1], [], []>} : vector<2x256xbf16>, vector<256x169xbf16>, vector<2x169xf32> -> vector<2x169xf32>
    %102 = vector.broadcast %1 : vector<2x1xf32> to vector<2x169xf32>
    %103 = arith.addf %101, %102 : vector<2x169xf32>
    %cst_66 = arith.constant 0.000000e+00 : f32
    %104 = vector.broadcast %cst_66 : f32 to vector<2x169xf32>
    %105 = arith.maximumf %103, %104 : vector<2x169xf32>
    %106 = vector.extract_strided_slice %105 {offsets = [0, 0], sizes = [1, 169], strides = [1, 1]} : vector<2x169xf32> to vector<1x169xf32>
    %c0_67 = arith.constant 0 : index
    %c6_68 = arith.constant 6 : index
    %c0_69 = arith.constant 0 : index
    %107 = vector.load %arg7[%c0_67, %c6_68, %c0_69] : memref<2x8x169xf32, #tpu.memory_space<vmem>>, vector<1x1x169xf32>
    %108 = vector.shape_cast %107 : vector<1x1x169xf32> to vector<1x169xf32>
    %109 = vector.shape_cast %106 : vector<1x169xf32> to vector<1x1x169xf32>
    tpu.vector_store %arg7[%c0_67, %c6_68, %c0_69], %109 {strides = array<i32>} : memref<2x8x169xf32, #tpu.memory_space<vmem>>, vector<1x1x169xf32>,
    %110 = vector.extract_strided_slice %105 {offsets = [1, 0], sizes = [1, 169], strides = [1, 1]} : vector<2x169xf32> to vector<1x169xf32>
    %c1_70 = arith.constant 1 : index
    %c6_71 = arith.constant 6 : index
    %c0_72 = arith.constant 0 : index
    %111 = vector.load %arg7[%c1_70, %c6_71, %c0_72] : memref<2x8x169xf32, #tpu.memory_space<vmem>>, vector<1x1x169xf32>
    %112 = vector.shape_cast %111 : vector<1x1x169xf32> to vector<1x169xf32>
    %113 = vector.shape_cast %110 : vector<1x169xf32> to vector<1x1x169xf32>
    tpu.vector_store %arg7[%c1_70, %c6_71, %c0_72], %113 {strides = array<i32>} : memref<2x8x169xf32, #tpu.memory_space<vmem>>, vector<1x1x169xf32>,
    %c7 = arith.constant 7 : index
    %c0_73 = arith.constant 0 : index
    %c0_74 = arith.constant 0 : index
    %114 = vector.load %arg1[%c7, %c0_73, %c0_74] : memref<8x256x169xf32, #tpu.memory_space<vmem>>, vector<1x256x169xf32>
    %115 = vector.shape_cast %114 : vector<1x256x169xf32> to vector<256x169xf32>
    %116 = arith.truncf %115 : vector<256x169xf32> to vector<256x169xbf16>
    %cst_75 = arith.constant dense<0.000000e+00> : vector<2x169xf32>
    %117 = tpu.matmul %0, %116, %cst_75 {dimension_numbers = #tpu.dot_dimension_numbers<[1], [0], [0], [1], [0, 0, 1, 1], [], []>} : vector<2x256xbf16>, vector<256x169xbf16>, vector<2x169xf32> -> vector<2x169xf32>
    %118 = vector.broadcast %1 : vector<2x1xf32> to vector<2x169xf32>
    %119 = arith.addf %117, %118 : vector<2x169xf32>
    %cst_76 = arith.constant 0.000000e+00 : f32
    %120 = vector.broadcast %cst_76 : f32 to vector<2x169xf32>
    %121 = arith.maximumf %119, %120 : vector<2x169xf32>
    %122 = vector.extract_strided_slice %121 {offsets = [0, 0], sizes = [1, 169], strides = [1, 1]} : vector<2x169xf32> to vector<1x169xf32>
    %c0_77 = arith.constant 0 : index
    %c7_78 = arith.constant 7 : index
    %c0_79 = arith.constant 0 : index
    %123 = vector.load %arg7[%c0_77, %c7_78, %c0_79] : memref<2x8x169xf32, #tpu.memory_space<vmem>>, vector<1x1x169xf32>
    %124 = vector.shape_cast %123 : vector<1x1x169xf32> to vector<1x169xf32>
    %125 = vector.shape_cast %122 : vector<1x169xf32> to vector<1x1x169xf32>
    tpu.vector_store %arg7[%c0_77, %c7_78, %c0_79], %125 {strides = array<i32>} : memref<2x8x169xf32, #tpu.memory_space<vmem>>, vector<1x1x169xf32>,
    %126 = vector.extract_strided_slice %121 {offsets = [1, 0], sizes = [1, 169], strides = [1, 1]} : vector<2x169xf32> to vector<1x169xf32>
    %c1_80 = arith.constant 1 : index
    %c7_81 = arith.constant 7 : index
    %c0_82 = arith.constant 0 : index
    %127 = vector.load %arg7[%c1_80, %c7_81, %c0_82] : memref<2x8x169xf32, #tpu.memory_space<vmem>>, vector<1x1x169xf32>
    %128 = vector.shape_cast %127 : vector<1x1x169xf32> to vector<1x169xf32>
    %129 = vector.shape_cast %126 : vector<1x169xf32> to vector<1x1x169xf32>
    tpu.vector_store %arg7[%c1_80, %c7_81, %c0_82], %129 {strides = array<i32>} : memref<2x8x169xf32, #tpu.memory_space<vmem>>, vector<1x1x169xf32>,
    %c0_83 = arith.constant 0 : index
    %c0_84 = arith.constant 0 : index
    %c0_85 = arith.constant 0 : index
    %130 = vector.load %arg7[%c0_83, %c0_84, %c0_85] : memref<2x8x169xf32, #tpu.memory_space<vmem>>, vector<1x8x169xf32>
    %131 = vector.shape_cast %130 : vector<1x8x169xf32> to vector<8x169xf32>
    %132 = arith.truncf %131 : vector<8x169xf32> to vector<8x169xbf16>
    %c0_86 = arith.constant 0 : index
    %c0_87 = arith.constant 0 : index
    %c0_88 = arith.constant 0 : index
    %133 = vector.load %arg4[%c0_86, %c0_87, %c0_88] : memref<2x169x256xbf16, #tpu.memory_space<vmem>>, vector<1x169x256xbf16>
    %134 = vector.shape_cast %133 : vector<1x169x256xbf16> to vector<169x256xbf16>
    %cst_89 = arith.constant dense<0.000000e+00> : vector<8x256xf32>
    %135 = tpu.matmul %132, %134, %cst_89 {dimension_numbers = #tpu.dot_dimension_numbers<[1], [0], [0], [1], [0, 0, 1, 1], [], []>} : vector<8x169xbf16>, vector<169x256xbf16>, vector<8x256xf32> -> vector<8x256xf32>
    %c1_90 = arith.constant 1 : index
    %c0_91 = arith.constant 0 : index
    %c0_92 = arith.constant 0 : index
    %136 = vector.load %arg7[%c1_90, %c0_91, %c0_92] : memref<2x8x169xf32, #tpu.memory_space<vmem>>, vector<1x8x169xf32>
    %137 = vector.shape_cast %136 : vector<1x8x169xf32> to vector<8x169xf32>
    %138 = arith.truncf %137 : vector<8x169xf32> to vector<8x169xbf16>
    %c1_93 = arith.constant 1 : index
    %c0_94 = arith.constant 0 : index
    %c0_95 = arith.constant 0 : index
    %139 = vector.load %arg4[%c1_93, %c0_94, %c0_95] : memref<2x169x256xbf16, #tpu.memory_space<vmem>>, vector<1x169x256xbf16>
    %140 = vector.shape_cast %139 : vector<1x169x256xbf16> to vector<169x256xbf16>
    %cst_96 = arith.constant dense<0.000000e+00> : vector<8x256xf32>
    %141 = tpu.matmul %138, %140, %cst_96 {dimension_numbers = #tpu.dot_dimension_numbers<[1], [0], [0], [1], [0, 0, 1, 1], [], []>} : vector<8x169xbf16>, vector<169x256xbf16>, vector<8x256xf32> -> vector<8x256xf32>
    %142 = arith.addf %135, %141 : vector<8x256xf32>
    %c0_97 = arith.constant 0 : index
    %c0_98 = arith.constant 0 : index
    %143 = vector.load %arg5[%c0_97, %c0_98] : memref<1x256xf32, #tpu.memory_space<vmem>>, vector<1x256xf32>
    %144 = vector.broadcast %143 : vector<1x256xf32> to vector<8x256xf32>
    %145 = arith.addf %142, %144 : vector<8x256xf32>
    %cst_99 = arith.constant dense<0xFF800000> : vector<8xf32>
    %146 = vector.multi_reduction <maximumf>, %145, %cst_99 [1] : vector<8x256xf32> to vector<8xf32>
    %147 = vector.shape_cast %146 : vector<8xf32> to vector<8x1xf32>
    %148 = vector.broadcast %147 : vector<8x1xf32> to vector<8x256xf32>
    %149 = arith.subf %145, %148 : vector<8x256xf32>
    %150 = math.exp %149 : vector<8x256xf32>
    %cst_100 = arith.constant dense<0.000000e+00> : vector<8xf32>
    %151 = vector.multi_reduction <add>, %150, %cst_100 [1] : vector<8x256xf32> to vector<8xf32>
    %152 = vector.shape_cast %151 : vector<8xf32> to vector<8x1xf32>
    %153 = tpu.reciprocal %152 {approx = true} : vector<8x1xf32> -> vector<8x1xf32>
    %154 = vector.broadcast %153 : vector<8x1xf32> to vector<8x256xf32>
    %155 = arith.mulf %150, %154 : vector<8x256xf32>
    %c0_101 = arith.constant 0 : index
    %c0_102 = arith.constant 0 : index
    %156 = vector.load %arg6[%c0_101, %c0_102] : memref<8x256xf32, #tpu.memory_space<vmem>>, vector<8x256xf32>
    tpu.vector_store %arg6[%c0_101, %c0_102], %155 {strides = array<i32>} : memref<8x256xf32, #tpu.memory_space<vmem>>, vector<8x256xf32>,
    return
  }
  func.func @transform_0(%arg0: i32) -> (i32, i32, i32) {
    %c0_i32 = arith.constant 0 : i32
    %c0_i32_0 = arith.constant 0 : i32
    %c0_i32_1 = arith.constant 0 : i32
    return %arg0, %c0_i32, %c0_i32_0 : i32, i32, i32
  }
  func.func @transform_1(%arg0: i32) -> (i32, i32) {
    %c0_i32 = arith.constant 0 : i32
    %c0_i32_0 = arith.constant 0 : i32
    %c0_i32_1 = arith.constant 0 : i32
    return %c0_i32, %c0_i32_0 : i32, i32
  }
  func.func @transform_2(%arg0: i32) -> (i32, i32) {
    %c0_i32 = arith.constant 0 : i32
    %c0_i32_0 = arith.constant 0 : i32
    %c0_i32_1 = arith.constant 0 : i32
    return %c0_i32, %c0_i32_0 : i32, i32
  }
  func.func @transform_3(%arg0: i32) -> (i32, i32, i32) {
    %c0_i32 = arith.constant 0 : i32
    %c0_i32_0 = arith.constant 0 : i32
    %c0_i32_1 = arith.constant 0 : i32
    %c0_i32_2 = arith.constant 0 : i32
    return %c0_i32, %c0_i32_0, %c0_i32_1 : i32, i32, i32
  }
  func.func @transform_4(%arg0: i32) -> (i32, i32) {
    %c0_i32 = arith.constant 0 : i32
    %c0_i32_0 = arith.constant 0 : i32
    %c0_i32_1 = arith.constant 0 : i32
    return %c0_i32, %c0_i32_0 : i32, i32
  }
  func.func @transform_5(%arg0: i32) -> (i32, i32) {
    %c0_i32 = arith.constant 0 : i32
    %c0_i32_0 = arith.constant 0 : i32
    return %arg0, %c0_i32 : i32, i32
  }
}

</mosaic_0001>

<llo_original>
// kernel: policy_head_forward.1
$region0: #{policy_head_forward.1}
  #allocation0 [shape = 'u32[]', space=smem, size = 0x4, offset = 0x4, fixed_abs, tag = 'smem constant byte address 0x4 - core index']
  #allocation1 [shape = 'u32[72,128]{1,0:T(1,128)}', space=vmem, size = 0x9000, scoped, tag = 'internal scratch']
  #allocation2 [shape = 'f32[2,8,169]{2,1,0:T(8,128)}', space=vmem, size = 0x4000, scoped, tag = 'scratch operand']
  %s0 = inlined_call_operand.vmem [shape: f32[8,256,169], index: 0, kind: input, shape index: {}]
  %s1 = inlined_call_operand.vmem [shape: bf16[2,256], index: 1, kind: input, shape index: {}]
  %s2 = inlined_call_operand.vmem [shape: f32[2,1], index: 2, kind: input, shape index: {}]
  %s3 = inlined_call_operand.vmem [shape: bf16[2,169,256], index: 3, kind: input, shape index: {}]
  %s4 = inlined_call_operand.vmem [shape: f32[1,256], index: 4, kind: input, shape index: {}]
  %s5 = inlined_call_operand.vmem [shape: f32[8,256], index: 5, kind: output, shape index: {}]
  %s6 = sld [smem:[#allocation0]]
  $region30: #{policy_head_forward.1} parent=0
    _
  %s8 = ssub.s32 1, %s6
  %s9 = scalar_select 0, %s8, %s6
  // Predicated region
  $region2: #{policy_head_forward.1} parent=0 // pred_check
    _
  $region3: #{policy_head_forward.1} parent=0 // pred_check_branch
    %11 = sbr.rel (0) target = $region5
  $region4: #{policy_head_forward.1} parent=0 // pred_region
    _
  $region5: #{policy_head_forward.1} parent=0 // pred_fallthru
    _
  // Predicated region
  $region6: #{policy_head_forward.1} parent=0 // pred_check
    _
  $region7: #{policy_head_forward.1} parent=0 // pred_check_branch
    %13 = sbr.rel (0) target = $region9
  $region8: #{policy_head_forward.1} parent=0 // pred_region
    _
  $region9: #{policy_head_forward.1} parent=0 // pred_fallthru
    _
  // Predicated region
  $region10: #{policy_head_forward.1} parent=0 // pred_check
    _
  $region11: #{policy_head_forward.1} parent=0 // pred_check_branch
    %15 = sbr.rel (0) target = $region13
  $region12: #{policy_head_forward.1} parent=0 // pred_region
    _
  $region13: #{policy_head_forward.1} parent=0 // pred_fallthru
    _
  // Predicated region
  $region14: #{policy_head_forward.1} parent=0 // pred_check
    _
  $region15: #{policy_head_forward.1} parent=0 // pred_check_branch
    %17 = sbr.rel (0) target = $region17
  $region16: #{policy_head_forward.1} parent=0 // pred_region
    _
  $region17: #{policy_head_forward.1} parent=0 // pred_fallthru
    _
  // Predicated region
  $region18: #{policy_head_forward.1} parent=0 // pred_check
    _
  $region19: #{policy_head_forward.1} parent=0 // pred_check_branch
    %19 = sbr.rel (0) target = $region21
  $region20: #{policy_head_forward.1} parent=0 // pred_region
    _
  $region21: #{policy_head_forward.1} parent=0 // pred_fallthru
    _
  %v21 = vld [vmem:[%s1] sm:$0x3]
  %v22 = vld [vmem:[%s2] sm:$0x3]
  %v23 = vld [vmem:[%s0] sm:$0xff]
  %v24 = vld [vmem:[%s0 + $0x8] sm:$0xff]
  %v25 = vld [vmem:[%s0 + $0x10] sm:$0xff]
  %v26 = vld [vmem:[%s0 + $0x18] sm:$0xff]
  %v27 = vld [vmem:[%s0 + $0x20] sm:$0xff]
  %v28 = vld [vmem:[%s0 + $0x28] sm:$0xff]
  %v29 = vld [vmem:[%s0 + $0x30] sm:$0xff]
  %v30 = vld [vmem:[%s0 + $0x38] sm:$0xff]
  %v31 = vld [vmem:[%s0 + $0x40] sm:$0xff]
  %v32 = vld [vmem:[%s0 + $0x48] sm:$0xff]
  %v33 = vld [vmem:[%s0 + $0x50] sm:$0xff]
  %v34 = vld [vmem:[%s0 + $0x58] sm:$0xff]
  %v35 = vld [vmem:[%s0 + $0x60] sm:$0xff]
  %v36 = vld [vmem:[%s0 + $0x68] sm:$0xff]
  %v37 = vld [vmem:[%s0 + $0x70] sm:$0xff]
  %v38 = vld [vmem:[%s0 + $0x78] sm:$0xff]
  %v39 = vld [vmem:[%s0 + $0x80] sm:$0xff]
  %v40 = vld [vmem:[%s0 + $0x88] sm:$0xff]
  %v41 = vld [vmem:[%s0 + $0x90] sm:$0xff]
  %v42 = vld [vmem:[%s0 + $0x98] sm:$0xff]
  %v43 = vld [vmem:[%s0 + $0xa0] sm:$0xff]
  %v44 = vld [vmem:[%s0 + $0xa8] sm:$0xff]
  %v45 = vld [vmem:[%s0 + $0xb0] sm:$0xff]
  %v46 = vld [vmem:[%s0 + $0xb8] sm:$0xff]
  %v47 = vld [vmem:[%s0 + $0xc0] sm:$0xff]
  %v48 = vld [vmem:[%s0 + $0xc8] sm:$0xff]
  %v49 = vld [vmem:[%s0 + $0xd0] sm:$0xff]
  %v50 = vld [vmem:[%s0 + $0xd8] sm:$0xff]
  %v51 = vld [vmem:[%s0 + $0xe0] sm:$0xff]
  %v52 = vld [vmem:[%s0 + $0xe8] sm:$0xff]
  %v53 = vld [vmem:[%s0 + $0xf0] sm:$0xff]
  %v54 = vld [vmem:[%s0 + $0xf8] sm:$0xff]
  %v55 = vld [vmem:[%s0 + $0x100] sm:$0xff]
  %v56 = vld [vmem:[%s0 + $0x108] sm:$0xff]
  %v57 = vld [vmem:[%s0 + $0x110] sm:$0xff]
  %v58 = vld [vmem:[%s0 + $0x118] sm:$0xff]
  %v59 = vld [vmem:[%s0 + $0x120] sm:$0xff]
  %v60 = vld [vmem:[%s0 + $0x128] sm:$0xff]
  %v61 = vld [vmem:[%s0 + $0x130] sm:$0xff]
  %v62 = vld [vmem:[%s0 + $0x138] sm:$0xff]
  %v63 = vld [vmem:[%s0 + $0x140] sm:$0xff]
  %v64 = vld [vmem:[%s0 + $0x148] sm:$0xff]
  %v65 = vld [vmem:[%s0 + $0x150] sm:$0xff]
  %v66 = vld [vmem:[%s0 + $0x158] sm:$0xff]
  %v67 = vld [vmem:[%s0 + $0x160] sm:$0xff]
  %v68 = vld [vmem:[%s0 + $0x168] sm:$0xff]
  %v69 = vld [vmem:[%s0 + $0x170] sm:$0xff]
  %v70 = vld [vmem:[%s0 + $0x178] sm:$0xff]
  %v71 = vld [vmem:[%s0 + $0x180] sm:$0xff]
  %v72 = vld [vmem:[%s0 + $0x188] sm:$0xff]
  %v73 = vld [vmem:[%s0 + $0x190] sm:$0xff]
  %v74 = vld [vmem:[%s0 + $0x198] sm:$0xff]
  %v75 = vld [vmem:[%s0 + $0x1a0] sm:$0xff]
  %v76 = vld [vmem:[%s0 + $0x1a8] sm:$0xff]
  %v77 = vld [vmem:[%s0 + $0x1b0] sm:$0xff]
  %v78 = vld [vmem:[%s0 + $0x1b8] sm:$0xff]
  %v79 = vld [vmem:[%s0 + $0x1c0] sm:$0xff]
  %v80 = vld [vmem:[%s0 + $0x1c8] sm:$0xff]
  %v81 = vld [vmem:[%s0 + $0x1d0] sm:$0xff]
  %v82 = vld [vmem:[%s0 + $0x1d8] sm:$0xff]
  %v83 = vld [vmem:[%s0 + $0x1e0] sm:$0xff]
  %v84 = vld [vmem:[%s0 + $0x1e8] sm:$0xff]
  %v85 = vld [vmem:[%s0 + $0x1f0] sm:$0xff]
  %v86 = vld [vmem:[%s0 + $0x1f8] sm:$0xff]
  %v87 = vpack.c.bf16 %v25, %v23
  %v88 = vpack.c.bf16 %v26, %v24
  %v89 = vpack.c.bf16 %v29, %v27
  %v90 = vpack.c.bf16 %v30, %v28
  %v91 = vpack.c.bf16 %v33, %v31
  %v92 = vpack.c.bf16 %v34, %v32
  %v93 = vpack.c.bf16 %v37, %v35
  %v94 = vpack.c.bf16 %v38, %v36
  %v95 = vpack.c.bf16 %v41, %v39
  %v96 = vpack.c.bf16 %v42, %v40
  %v97 = vpack.c.bf16 %v45, %v43
  %v98 = vpack.c.bf16 %v46, %v44
  %v99 = vpack.c.bf16 %v49, %v47
  %v100 = vpack.c.bf16 %v50, %v48
  %v101 = vpack.c.bf16 %v53, %v51
  %v102 = vpack.c.bf16 %v54, %v52
  %v103 = vpack.c.bf16 %v57, %v55
  %v104 = vpack.c.bf16 %v58, %v56
  %v105 = vpack.c.bf16 %v61, %v59
  %v106 = vpack.c.bf16 %v62, %v60
  %v107 = vpack.c.bf16 %v65, %v63
  %v108 = vpack.c.bf16 %v66, %v64
  %v109 = vpack.c.bf16 %v69, %v67
  %v110 = vpack.c.bf16 %v70, %v68
  %v111 = vpack.c.bf16 %v73, %v71
  %v112 = vpack.c.bf16 %v74, %v72
  %v113 = vpack.c.bf16 %v77, %v75
  %v114 = vpack.c.bf16 %v78, %v76
  %v115 = vpack.c.bf16 %v81, %v79
  %v116 = vpack.c.bf16 %v82, %v80
  %v117 = vpack.c.bf16 %v85, %v83
  %v118 = vpack.c.bf16 %v86, %v84
  %120 = vset.pattern.permute.xlu0 0
  %121 = vperm.xlu0 %120, %v22
  %v122 = vpop.permute.xlu0 %121
  %125 = vst [vmem:[#allocation1] ss:$9 sm:$0xff] %v21
  %v126 = vld [vmem:[#allocation1] sm:$0xff]
  %v127 = vld [vmem:[#allocation1 + $0x9] sm:$0xff]
  %130 = vmatpush.bf16.msra.mxu0 %v101
  %131 = vmatpush.bf16.msra.mxu0 %v99
  %132 = vmatpush.bf16.msra.mxu0 %v97
  %133 = vmatpush.bf16.msra.mxu0 %v95
  %134 = vmatpush.bf16.msra.mxu0 %v93
  %135 = vmatpush.bf16.msra.mxu0 %v91
  %136 = vmatpush.bf16.msra.mxu0 %v89
  %137 = vmatpush.bf16.msra.mxu0 %v87
  %138 = vmatmul.bf16.gmra.mxu0 %v126
  %v139 = vpop.f32.mrf.mxu0
  %v140 = vadd.f32 %v122, %v139
  %v141 = vpop.f32.mrf.mxu0
  %142 = vdwg.mxu0
  %143 = vmatpush.bf16.msra.mxu0 %v117
  %144 = vmatpush.bf16.msra.mxu0 %v115
  %145 = vmatpush.bf16.msra.mxu0 %v113
  %146 = vmatpush.bf16.msra.mxu0 %v111
  %147 = vmatpush.bf16.msra.mxu0 %v109
  %148 = vmatpush.bf16.msra.mxu0 %v107
  %149 = vmatpush.bf16.msra.mxu0 %v105
  %150 = vmatpush.bf16.msra.mxu0 %v103
  %151 = vmatmul.bf16.gmra.mxu0 %v127
  %v152 = vpop.f32.mrf.mxu0
  %v153 = vadd.f32 %v140, %v152
  %v154 = vpop.f32.mrf.mxu0
  %155 = vdwg.mxu0
  %156 = vmatpush.bf16.msra.mxu0 %v102
  %157 = vmatpush.bf16.msra.mxu0 %v100
  %158 = vmatpush.bf16.msra.mxu0 %v98
  %159 = vmatpush.bf16.msra.mxu0 %v96
  %160 = vmatpush.bf16.msra.mxu0 %v94
  %161 = vmatpush.bf16.msra.mxu0 %v92
  %162 = vmatpush.bf16.msra.mxu0 %v90
  %163 = vmatpush.bf16.msra.mxu0 %v88
  %164 = vmatmul.bf16.gmra.mxu0 %v126
  %v165 = vpop.f32.mrf.mxu0
  %v166 = vadd.f32 %v122, %v165
  %v167 = vpop.f32.mrf.mxu0
  %168 = vdwg.mxu0
  %169 = vmatpush.bf16.msra.mxu0 %v118
  %170 = vmatpush.bf16.msra.mxu0 %v116
  %171 = vmatpush.bf16.msra.mxu0 %v114
  %172 = vmatpush.bf16.msra.mxu0 %v112
  %173 = vmatpush.bf16.msra.mxu0 %v110
  %174 = vmatpush.bf16.msra.mxu0 %v108
  %175 = vmatpush.bf16.msra.mxu0 %v106
  %176 = vmatpush.bf16.msra.mxu0 %v104
  %177 = vmatmul.bf16.gmra.mxu0 %v127
  %v178 = vpop.f32.mrf.mxu0
  %v179 = vadd.f32 %v166, %v178
  %v180 = vpop.f32.mrf.mxu0
  %181 = vdwg.mxu0
  %v182 = vmax.f32 %v153, 0.0
  %v183 = vmax.f32 %v179, 0.0
  %v186 = vrot.slane %v183, 7
  %vm187 = vcmask 1040384
  %v188 = vsel %vm187, %v182, %v186
  %v190 = vlaneseq
  %vm191 = vcmp.ge.s32.totalorder %v190, 0
  %vm192 = vcmp.lt.s32.totalorder %v190, 169
  %vm193 = vmand %vm191, %vm192
  %194 = vst.msk [vmem:[#allocation2] ss:$8 sm:$0x3] %vm193, %v188
  %195 = vst.msk [vmem:[#allocation2] ss:$8 sm:$0x0] %vm193, %v188
  %196 = vst [vmem:[#allocation1] sm:$0xff] %v182
  %197 = vst [vmem:[#allocation1 + $0x9] sm:$0xff] %v183
  %s198 = scalar_lea.vmem [#allocation1], 1
  %v199 = vld [vmem:[%s198] ss:$9 sm:$0xff]
  %s201 = scalar_lea.vmem [#allocation2], 16
  %202 = vst.msk [vmem:[%s201] ss:$8 sm:$0x3] %vm193, %v199
  %203 = vst.msk [vmem:[%s201] ss:$8 sm:$0x0] %vm193, %v199
  %s204 = scalar_lea.vmem %s0, 512
  %v205 = vld [vmem:[%s204] sm:$0xff]
  %v206 = vld [vmem:[%s204 + $0x8] sm:$0xff]
  %v207 = vld [vmem:[%s204 + $0x10] sm:$0xff]
  %v208 = vld [vmem:[%s204 + $0x18] sm:$0xff]
  %v209 = vld [vmem:[%s204 + $0x20] sm:$0xff]
  %v210 = vld [vmem:[%s204 + $0x28] sm:$0xff]
  %v211 = vld [vmem:[%s204 + $0x30] sm:$0xff]
  %v212 = vld [vmem:[%s204 + $0x38] sm:$0xff]
  %v213 = vld [vmem:[%s204 + $0x40] sm:$0xff]
  %v214 = vld [vmem:[%s204 + $0x48] sm:$0xff]
  %v215 = vld [vmem:[%s204 + $0x50] sm:$0xff]
  %v216 = vld [vmem:[%s204 + $0x58] sm:$0xff]
  %v217 = vld [vmem:[%s204 + $0x60] sm:$0xff]
  %v218 = vld [vmem:[%s204 + $0x68] sm:$0xff]
  %v219 = vld [vmem:[%s204 + $0x70] sm:$0xff]
  %v220 = vld [vmem:[%s204 + $0x78] sm:$0xff]
  %v221 = vld [vmem:[%s204 + $0x80] sm:$0xff]
  %v222 = vld [vmem:[%s204 + $0x88] sm:$0xff]
  %v223 = vld [vmem:[%s204 + $0x90] sm:$0xff]
  %v224 = vld [vmem:[%s204 + $0x98] sm:$0xff]
  %v225 = vld [vmem:[%s204 + $0xa0] sm:$0xff]
  %v226 = vld [vmem:[%s204 + $0xa8] sm:$0xff]
  %v227 = vld [vmem:[%s204 + $0xb0] sm:$0xff]
  %v228 = vld [vmem:[%s204 + $0xb8] sm:$0xff]
  %v229 = vld [vmem:[%s204 + $0xc0] sm:$0xff]
  %v230 = vld [vmem:[%s204 + $0xc8] sm:$0xff]
  %v231 = vld [vmem:[%s204 + $0xd0] sm:$0xff]
  %v232 = vld [vmem:[%s204 + $0xd8] sm:$0xff]
  %v233 = vld [vmem:[%s204 + $0xe0] sm:$0xff]
  %v234 = vld [vmem:[%s204 + $0xe8] sm:$0xff]
  %v235 = vld [vmem:[%s204 + $0xf0] sm:$0xff]
  %v236 = vld [vmem:[%s204 + $0xf8] sm:$0xff]
  %v237 = vld [vmem:[%s204 + $0x100] sm:$0xff]
  %v238 = vld [vmem:[%s204 + $0x108] sm:$0xff]
  %v239 = vld [vmem:[%s204 + $0x110] sm:$0xff]
  %v240 = vld [vmem:[%s204 + $0x118] sm:$0xff]
  %v241 = vld [vmem:[%s204 + $0x120] sm:$0xff]
  %v242 = vld [vmem:[%s204 + $0x128] sm:$0xff]
  %v243 = vld [vmem:[%s204 + $0x130] sm:$0xff]
  %v244 = vld [vmem:[%s204 + $0x138] sm:$0xff]
  %v245 = vld [vmem:[%s204 + $0x140] sm:$0xff]
  %v246 = vld [vmem:[%s204 + $0x148] sm:$0xff]
  %v247 = vld [vmem:[%s204 + $0x150] sm:$0xff]
  %v248 = vld [vmem:[%s204 + $0x158] sm:$0xff]
  %v249 = vld [vmem:[%s204 + $0x160] sm:$0xff]
  %v250 = vld [vmem:[%s204 + $0x168] sm:$0xff]
  %v251 = vld [vmem:[%s204 + $0x170] sm:$0xff]
  %v252 = vld [vmem:[%s204 + $0x178] sm:$0xff]
  %v253 = vld [vmem:[%s204 + $0x180] sm:$0xff]
  %v254 = vld [vmem:[%s204 + $0x188] sm:$0xff]
  %v255 = vld [vmem:[%s204 + $0x190] sm:$0xff]
  %v256 = vld [vmem:[%s204 + $0x198] sm:$0xff]
  %v257 = vld [vmem:[%s204 + $0x1a0] sm:$0xff]
  %v258 = vld [vmem:[%s204 + $0x1a8] sm:$0xff]
  %v259 = vld [vmem:[%s204 + $0x1b0] sm:$0xff]
  %v260 = vld [vmem:[%s204 + $0x1b8] sm:$0xff]
  %v261 = vld [vmem:[%s204 + $0x1c0] sm:$0xff]
  %v262 = vld [vmem:[%s204 + $0x1c8] sm:$0xff]
  %v263 = vld [vmem:[%s204 + $0x1d0] sm:$0xff]
  %v264 = vld [vmem:[%s204 + $0x1d8] sm:$0xff]
  %v265 = vld [vmem:[%s204 + $0x1e0] sm:$0xff]
  %v266 = vld [vmem:[%s204 + $0x1e8] sm:$0xff]
  %v267 = vld [vmem:[%s204 + $0x1f0] sm:$0xff]
  %v268 = vld [vmem:[%s204 + $0x1f8] sm:$0xff]
  %v269 = vpack.c.bf16 %v207, %v205
  %v270 = vpack.c.bf16 %v208, %v206
  %v271 = vpack.c.bf16 %v211, %v209
  %v272 = vpack.c.bf16 %v212, %v210
  %v273 = vpack.c.bf16 %v215, %v213
  %v274 = vpack.c.bf16 %v216, %v214
  %v275 = vpack.c.bf16 %v219, %v217
  %v276 = vpack.c.bf16 %v220, %v218
  %v277 = vpack.c.bf16 %v223, %v221
  %v278 = vpack.c.bf16 %v224, %v222
  %v279 = vpack.c.bf16 %v227, %v225
  %v280 = vpack.c.bf16 %v228, %v226
  %v281 = vpack.c.bf16 %v231, %v229
  %v282 = vpack.c.bf16 %v232, %v230
  %v283 = vpack.c.bf16 %v235, %v233
  %v284 = vpack.c.bf16 %v236, %v234
  %v285 = vpack.c.bf16 %v239, %v237
  %v286 = vpack.c.bf16 %v240, %v238
  %v287 = vpack.c.bf16 %v243, %v241
  %v288 = vpack.c.bf16 %v244, %v242
  %v289 = vpack.c.bf16 %v247, %v245
  %v290 = vpack.c.bf16 %v248, %v246
  %v291 = vpack.c.bf16 %v251, %v249
  %v292 = vpack.c.bf16 %v252, %v250
  %v293 = vpack.c.bf16 %v255, %v253
  %v294 = vpack.c.bf16 %v256, %v254
  %v295 = vpack.c.bf16 %v259, %v257
  %v296 = vpack.c.bf16 %v260, %v258
  %v297 = vpack.c.bf16 %v263, %v261
  %v298 = vpack.c.bf16 %v264, %v262
  %v299 = vpack.c.bf16 %v267, %v265
  %v300 = vpack.c.bf16 %v268, %v266
  %301 = vst [vmem:[#allocation1] ss:$9 sm:$0xff] %v21
  %v302 = vld [vmem:[#allocation1] sm:$0xff]
  %v303 = vld [vmem:[#allocation1 + $0x9] sm:$0xff]
  %306 = vmatpush.bf16.msra.mxu0 %v283
  %307 = vmatpush.bf16.msra.mxu0 %v281
  %308 = vmatpush.bf16.msra.mxu0 %v279
  %309 = vmatpush.bf16.msra.mxu0 %v277
  %310 = vmatpush.bf16.msra.mxu0 %v275
  %311 = vmatpush.bf16.msra.mxu0 %v273
  %312 = vmatpush.bf16.msra.mxu0 %v271
  %313 = vmatpush.bf16.msra.mxu0 %v269
  %314 = vmatmul.bf16.gmra.mxu0 %v302
  %v315 = vpop.f32.mrf.mxu0
  %v316 = vadd.f32 %v122, %v315
  %v317 = vpop.f32.mrf.mxu0
  %318 = vdwg.mxu0
  %319 = vmatpush.bf16.msra.mxu0 %v299
  %320 = vmatpush.bf16.msra.mxu0 %v297
  %321 = vmatpush.bf16.msra.mxu0 %v295
  %322 = vmatpush.bf16.msra.mxu0 %v293
  %323 = vmatpush.bf16.msra.mxu0 %v291
  %324 = vmatpush.bf16.msra.mxu0 %v289
  %325 = vmatpush.bf16.msra.mxu0 %v287
  %326 = vmatpush.bf16.msra.mxu0 %v285
  %327 = vmatmul.bf16.gmra.mxu0 %v303
  %v328 = vpop.f32.mrf.mxu0
  %v329 = vadd.f32 %v316, %v328
  %v330 = vpop.f32.mrf.mxu0
  %331 = vdwg.mxu0
  %332 = vmatpush.bf16.msra.mxu0 %v284
  %333 = vmatpush.bf16.msra.mxu0 %v282
  %334 = vmatpush.bf16.msra.mxu0 %v280
  %335 = vmatpush.bf16.msra.mxu0 %v278
  %336 = vmatpush.bf16.msra.mxu0 %v276
  %337 = vmatpush.bf16.msra.mxu0 %v274
  %338 = vmatpush.bf16.msra.mxu0 %v272
  %339 = vmatpush.bf16.msra.mxu0 %v270
  %340 = vmatmul.bf16.gmra.mxu0 %v302
  %v341 = vpop.f32.mrf.mxu0
  %v342 = vadd.f32 %v122, %v341
  %v343 = vpop.f32.mrf.mxu0
  %344 = vdwg.mxu0
  %345 = vmatpush.bf16.msra.mxu0 %v300
  %346 = vmatpush.bf16.msra.mxu0 %v298
  %347 = vmatpush.bf16.msra.mxu0 %v296
  %348 = vmatpush.bf16.msra.mxu0 %v294
  %349 = vmatpush.bf16.msra.mxu0 %v292
  %350 = vmatpush.bf16.msra.mxu0 %v290
  %351 = vmatpush.bf16.msra.mxu0 %v288
  %352 = vmatpush.bf16.msra.mxu0 %v286
  %353 = vmatmul.bf16.gmra.mxu0 %v303
  %v354 = vpop.f32.mrf.mxu0
  %v355 = vadd.f32 %v342, %v354
  %v356 = vpop.f32.mrf.mxu0
  %357 = vdwg.mxu0
  %v358 = vmax.f32 %v329, 0.0
  %v359 = vmax.f32 %v355, 0.0
  %v362 = vrot.slane %v359, 7
  %v363 = vsel %vm187, %v358, %v362
  %s365 = scalar_lea.vmem [#allocation2], 1
  %366 = vst.msk [vmem:[%s365] ss:$8 sm:$0x3] %vm193, %v363
  %367 = vst.msk [vmem:[%s365] ss:$8 sm:$0x0] %vm193, %v363
  %368 = vst [vmem:[#allocation1] sm:$0xff] %v358
  %369 = vst [vmem:[#allocation1 + $0x9] sm:$0xff] %v359
  %s370 = scalar_lea.vmem [#allocation1], 1
  %v371 = vld [vmem:[%s370] ss:$9 sm:$0xff]
  %s373 = scalar_lea.vmem %s201, 1 [#allocation2]
  %374 = vst.msk [vmem:[%s373] ss:$8 sm:$0x3] %vm193, %v371
  %375 = vst.msk [vmem:[%s373] ss:$8 sm:$0x0] %vm193, %v371
  %s376 = scalar_lea.vmem %s0, 1024
  %v377 = vld [vmem:[%s376] sm:$0xff]
  %v378 = vld [vmem:[%s376 + $0x8] sm:$0xff]
  %v379 = vld [vmem:[%s376 + $0x10] sm:$0xff]
  %v380 = vld [vmem:[%s376 + $0x18] sm:$0xff]
  %v381 = vld [vmem:[%s376 + $0x20] sm:$0xff]
  %v382 = vld [vmem:[%s376 + $0x28] sm:$0xff]
  %v383 = vld [vmem:[%s376 + $0x30] sm:$0xff]
  %v384 = vld [vmem:[%s376 + $0x38] sm:$0xff]
  %v385 = vld [vmem:[%s376 + $0x40] sm:$0xff]
  %v386 = vld [vmem:[%s376 + $0x48] sm:$0xff]
  %v387 = vld [vmem:[%s376 + $0x50] sm:$0xff]
  %v388 = vld [vmem:[%s376 + $0x58] sm:$0xff]
  %v389 = vld [vmem:[%s376 + $0x60] sm:$0xff]
  %v390 = vld [vmem:[%s376 + $0x68] sm:$0xff]
  %v391 = vld [vmem:[%s376 + $0x70] sm:$0xff]
  %v392 = vld [vmem:[%s376 + $0x78] sm:$0xff]
  %v393 = vld [vmem:[%s376 + $0x80] sm:$0xff]
  %v394 = vld [vmem:[%s376 + $0x88] sm:$0xff]
  %v395 = vld [vmem:[%s376 + $0x90] sm:$0xff]
  %v396 = vld [vmem:[%s376 + $0x98] sm:$0xff]
  %v397 = vld [vmem:[%s376 + $0xa0] sm:$0xff]
  %v398 = vld [vmem:[%s376 + $0xa8] sm:$0xff]
  %v399 = vld [vmem:[%s376 + $0xb0] sm:$0xff]
  %v400 = vld [vmem:[%s376 + $0xb8] sm:$0xff]
  %v401 = vld [vmem:[%s376 + $0xc0] sm:$0xff]
  %v402 = vld [vmem:[%s376 + $0xc8] sm:$0xff]
  %v403 = vld [vmem:[%s376 + $0xd0] sm:$0xff]
  %v404 = vld [vmem:[%s376 + $0xd8] sm:$0xff]
  %v405 = vld [vmem:[%s376 + $0xe0] sm:$0xff]
  %v406 = vld [vmem:[%s376 + $0xe8] sm:$0xff]
  %v407 = vld [vmem:[%s376 + $0xf0] sm:$0xff]
  %v408 = vld [vmem:[%s376 + $0xf8] sm:$0xff]
  %v409 = vld [vmem:[%s376 + $0x100] sm:$0xff]
  %v410 = vld [vmem:[%s376 + $0x108] sm:$0xff]
  %v411 = vld [vmem:[%s376 + $0x110] sm:$0xff]
  %v412 = vld [vmem:[%s376 + $0x118] sm:$0xff]
  %v413 = vld [vmem:[%s376 + $0x120] sm:$0xff]
  %v414 = vld [vmem:[%s376 + $0x128] sm:$0xff]
  %v415 = vld [vmem:[%s376 + $0x130] sm:$0xff]
  %v416 = vld [vmem:[%s376 + $0x138] sm:$0xff]
  %v417 = vld [vmem:[%s376 + $0x140] sm:$0xff]
  %v418 = vld [vmem:[%s376 + $0x148] sm:$0xff]
  %v419 = vld [vmem:[%s376 + $0x150] sm:$0xff]
  %v420 = vld [vmem:[%s376 + $0x158] sm:$0xff]
  %v421 = vld [vmem:[%s376 + $0x160] sm:$0xff]
  %v422 = vld [vmem:[%s376 + $0x168] sm:$0xff]
  %v423 = vld [vmem:[%s376 + $0x170] sm:$0xff]
  %v424 = vld [vmem:[%s376 + $0x178] sm:$0xff]
  %v425 = vld [vmem:[%s376 + $0x180] sm:$0xff]
  %v426 = vld [vmem:[%s376 + $0x188] sm:$0xff]
  %v427 = vld [vmem:[%s376 + $0x190] sm:$0xff]
  %v428 = vld [vmem:[%s376 + $0x198] sm:$0xff]
  %v429 = vld [vmem:[%s376 + $0x1a0] sm:$0xff]
  %v430 = vld [vmem:[%s376 + $0x1a8] sm:$0xff]
  %v431 = vld [vmem:[%s376 + $0x1b0] sm:$0xff]
  %v432 = vld [vmem:[%s376 + $0x1b8] sm:$0xff]
  %v433 = vld [vmem:[%s376 + $0x1c0] sm:$0xff]
  %v434 = vld [vmem:[%s376 + $0x1c8] sm:$0xff]
  %v435 = vld [vmem:[%s376 + $0x1d0] sm:$0xff]
  %v436 = vld [vmem:[%s376 + $0x1d8] sm:$0xff]
  %v437 = vld [vmem:[%s376 + $0x1e0] sm:$0xff]
  %v438 = vld [vmem:[%s376 + $0x1e8] sm:$0xff]
  %v439 = vld [vmem:[%s376 + $0x1f0] sm:$0xff]
  %v440 = vld [vmem:[%s376 + $0x1f8] sm:$0xff]
  %v441 = vpack.c.bf16 %v379, %v377
  %v442 = vpack.c.bf16 %v380, %v378
  %v443 = vpack.c.bf16 %v383, %v381
  %v444 = vpack.c.bf16 %v384, %v382
  %v445 = vpack.c.bf16 %v387, %v385
  %v446 = vpack.c.bf16 %v388, %v386
  %v447 = vpack.c.bf16 %v391, %v389
  %v448 = vpack.c.bf16 %v392, %v390
  %v449 = vpack.c.bf16 %v395, %v393
  %v450 = vpack.c.bf16 %v396, %v394
  %v451 = vpack.c.bf16 %v399, %v397
  %v452 = vpack.c.bf16 %v400, %v398
  %v453 = vpack.c.bf16 %v403, %v401
  %v454 = vpack.c.bf16 %v404, %v402
  %v455 = vpack.c.bf16 %v407, %v405
  %v456 = vpack.c.bf16 %v408, %v406
  %v457 = vpack.c.bf16 %v411, %v409
  %v458 = vpack.c.bf16 %v412, %v410
  %v459 = vpack.c.bf16 %v415, %v413
  %v460 = vpack.c.bf16 %v416, %v414
  %v461 = vpack.c.bf16 %v419, %v417
  %v462 = vpack.c.bf16 %v420, %v418
  %v463 = vpack.c.bf16 %v423, %v421
  %v464 = vpack.c.bf16 %v424, %v422
  %v465 = vpack.c.bf16 %v427, %v425
  %v466 = vpack.c.bf16 %v428, %v426
  %v467 = vpack.c.bf16 %v431, %v429
  %v468 = vpack.c.bf16 %v432, %v430
  %v469 = vpack.c.bf16 %v435, %v433
  %v470 = vpack.c.bf16 %v436, %v434
  %v471 = vpack.c.bf16 %v439, %v437
  %v472 = vpack.c.bf16 %v440, %v438
  %473 = vst [vmem:[#allocation1] ss:$9 sm:$0xff] %v21
  %v474 = vld [vmem:[#allocation1] sm:$0xff]
  %v475 = vld [vmem:[#allocation1 + $0x9] sm:$0xff]
  %478 = vmatpush.bf16.msra.mxu0 %v455
  %479 = vmatpush.bf16.msra.mxu0 %v453
  %480 = vmatpush.bf16.msra.mxu0 %v451
  %481 = vmatpush.bf16.msra.mxu0 %v449
  %482 = vmatpush.bf16.msra.mxu0 %v447
  %483 = vmatpush.bf16.msra.mxu0 %v445
  %484 = vmatpush.bf16.msra.mxu0 %v443
  %485 = vmatpush.bf16.msra.mxu0 %v441
  %486 = vmatmul.bf16.gmra.mxu0 %v474
  %v487 = vpop.f32.mrf.mxu0
  %v488 = vadd.f32 %v122, %v487
  %v489 = vpop.f32.mrf.mxu0
  %490 = vdwg.mxu0
  %491 = vmatpush.bf16.msra.mxu0 %v471
  %492 = vmatpush.bf16.msra.mxu0 %v469
  %493 = vmatpush.bf16.msra.mxu0 %v467
  %494 = vmatpush.bf16.msra.mxu0 %v465
  %495 = vmatpush.bf16.msra.mxu0 %v463
  %496 = vmatpush.bf16.msra.mxu0 %v461
  %497 = vmatpush.bf16.msra.mxu0 %v459
  %498 = vmatpush.bf16.msra.mxu0 %v457
  %499 = vmatmul.bf16.gmra.mxu0 %v475
  %v500 = vpop.f32.mrf.mxu0
  %v501 = vadd.f32 %v488, %v500
  %v502 = vpop.f32.mrf.mxu0
  %503 = vdwg.mxu0
  %504 = vmatpush.bf16.msra.mxu0 %v456
  %505 = vmatpush.bf16.msra.mxu0 %v454
  %506 = vmatpush.bf16.msra.mxu0 %v452
  %507 = vmatpush.bf16.msra.mxu0 %v450
  %508 = vmatpush.bf16.msra.mxu0 %v448
  %509 = vmatpush.bf16.msra.mxu0 %v446
  %510 = vmatpush.bf16.msra.mxu0 %v444
  %511 = vmatpush.bf16.msra.mxu0 %v442
  %512 = vmatmul.bf16.gmra.mxu0 %v474
  %v513 = vpop.f32.mrf.mxu0
  %v514 = vadd.f32 %v122, %v513
  %v515 = vpop.f32.mrf.mxu0
  %516 = vdwg.mxu0
  %517 = vmatpush.bf16.msra.mxu0 %v472
  %518 = vmatpush.bf16.msra.mxu0 %v470
  %519 = vmatpush.bf16.msra.mxu0 %v468
  %520 = vmatpush.bf16.msra.mxu0 %v466
  %521 = vmatpush.bf16.msra.mxu0 %v464
  %522 = vmatpush.bf16.msra.mxu0 %v462
  %523 = vmatpush.bf16.msra.mxu0 %v460
  %524 = vmatpush.bf16.msra.mxu0 %v458
  %525 = vmatmul.bf16.gmra.mxu0 %v475
  %v526 = vpop.f32.mrf.mxu0
  %v527 = vadd.f32 %v514, %v526
  %v528 = vpop.f32.mrf.mxu0
  %529 = vdwg.mxu0
  %v530 = vmax.f32 %v501, 0.0
  %v531 = vmax.f32 %v527, 0.0
  %v534 = vrot.slane %v531, 7
  %v535 = vsel %vm187, %v530, %v534
  %s537 = scalar_lea.vmem [#allocation2], 2
  %538 = vst.msk [vmem:[%s537] ss:$8 sm:$0x3] %vm193, %v535
  %539 = vst.msk [vmem:[%s537] ss:$8 sm:$0x0] %vm193, %v535
  %540 = vst [vmem:[#allocation1] sm:$0xff] %v530
  %541 = vst [vmem:[#allocation1 + $0x9] sm:$0xff] %v531
  %s542 = scalar_lea.vmem [#allocation1], 1
  %v543 = vld [vmem:[%s542] ss:$9 sm:$0xff]
  %s545 = scalar_lea.vmem %s201, 2 [#allocation2]
  %546 = vst.msk [vmem:[%s545] ss:$8 sm:$0x3] %vm193, %v543
  %547 = vst.msk [vmem:[%s545] ss:$8 sm:$0x0] %vm193, %v543
  %s548 = scalar_lea.vmem %s0, 1536
  %v549 = vld [vmem:[%s548] sm:$0xff]
  %v550 = vld [vmem:[%s548 + $0x8] sm:$0xff]
  %v551 = vld [vmem:[%s548 + $0x10] sm:$0xff]
  %v552 = vld [vmem:[%s548 + $0x18] sm:$0xff]
  %v553 = vld [vmem:[%s548 + $0x20] sm:$0xff]
  %v554 = vld [vmem:[%s548 + $0x28] sm:$0xff]
  %v555 = vld [vmem:[%s548 + $0x30] sm:$0xff]
  %v556 = vld [vmem:[%s548 + $0x38] sm:$0xff]
  %v557 = vld [vmem:[%s548 + $0x40] sm:$0xff]
  %v558 = vld [vmem:[%s548 + $0x48] sm:$0xff]
  %v559 = vld [vmem:[%s548 + $0x50] sm:$0xff]
  %v560 = vld [vmem:[%s548 + $0x58] sm:$0xff]
  %v561 = vld [vmem:[%s548 + $0x60] sm:$0xff]
  %v562 = vld [vmem:[%s548 + $0x68] sm:$0xff]
  %v563 = vld [vmem:[%s548 + $0x70] sm:$0xff]
  %v564 = vld [vmem:[%s548 + $0x78] sm:$0xff]
  %v565 = vld [vmem:[%s548 + $0x80] sm:$0xff]
  %v566 = vld [vmem:[%s548 + $0x88] sm:$0xff]
  %v567 = vld [vmem:[%s548 + $0x90] sm:$0xff]
  %v568 = vld [vmem:[%s548 + $0x98] sm:$0xff]
  %v569 = vld [vmem:[%s548 + $0xa0] sm:$0xff]
  %v570 = vld [vmem:[%s548 + $0xa8] sm:$0xff]
  %v571 = vld [vmem:[%s548 + $0xb0] sm:$0xff]
  %v572 = vld [vmem:[%s548 + $0xb8] sm:$0xff]
  %v573 = vld [vmem:[%s548 + $0xc0] sm:$0xff]
  %v574 = vld [vmem:[%s548 + $0xc8] sm:$0xff]
  %v575 = vld [vmem:[%s548 + $0xd0] sm:$0xff]
  %v576 = vld [vmem:[%s548 + $0xd8] sm:$0xff]
  %v577 = vld [vmem:[%s548 + $0xe0] sm:$0xff]
  %v578 = vld [vmem:[%s548 + $0xe8] sm:$0xff]
  %v579 = vld [vmem:[%s548 + $0xf0] sm:$0xff]
  %v580 = vld [vmem:[%s548 + $0xf8] sm:$0xff]
  %v581 = vld [vmem:[%s548 + $0x100] sm:$0xff]
  %v582 = vld [vmem:[%s548 + $0x108] sm:$0xff]
  %v583 = vld [vmem:[%s548 + $0x110] sm:$0xff]
  %v584 = vld [vmem:[%s548 + $0x118] sm:$0xff]
  %v585 = vld [vmem:[%s548 + $0x120] sm:$0xff]
  %v586 = vld [vmem:[%s548 + $0x128] sm:$0xff]
  %v587 = vld [vmem:[%s548 + $0x130] sm:$0xff]
  %v588 = vld [vmem:[%s548 + $0x138] sm:$0xff]
  %v589 = vld [vmem:[%s548 + $0x140] sm:$0xff]
  %v590 = vld [vmem:[%s548 + $0x148] sm:$0xff]
  %v591 = vld [vmem:[%s548 + $0x150] sm:$0xff]
  %v592 = vld [vmem:[%s548 + $0x158] sm:$0xff]
  %v593 = vld [vmem:[%s548 + $0x160] sm:$0xff]
  %v594 = vld [vmem:[%s548 + $0x168] sm:$0xff]
  %v595 = vld [vmem:[%s548 + $0x170] sm:$0xff]
  %v596 = vld [vmem:[%s548 + $0x178] sm:$0xff]
  %v597 = vld [vmem:[%s548 + $0x180] sm:$0xff]
  %v598 = vld [vmem:[%s548 + $0x188] sm:$0xff]
  %v599 = vld [vmem:[%s548 + $0x190] sm:$0xff]
  %v600 = vld [vmem:[%s548 + $0x198] sm:$0xff]
  %v601 = vld [vmem:[%s548 + $0x1a0] sm:$0xff]
  %v602 = vld [vmem:[%s548 + $0x1a8] sm:$0xff]
  %v603 = vld [vmem:[%s548 + $0x1b0] sm:$0xff]
  %v604 = vld [vmem:[%s548 + $0x1b8] sm:$0xff]
  %v605 = vld [vmem:[%s548 + $0x1c0] sm:$0xff]
  %v606 = vld [vmem:[%s548 + $0x1c8] sm:$0xff]
  %v607 = vld [vmem:[%s548 + $0x1d0] sm:$0xff]
  %v608 = vld [vmem:[%s548 + $0x1d8] sm:$0xff]
  %v609 = vld [vmem:[%s548 + $0x1e0] sm:$0xff]
  %v610 = vld [vmem:[%s548 + $0x1e8] sm:$0xff]
  %v611 = vld [vmem:[%s548 + $0x1f0] sm:$0xff]
  %v612 = vld [vmem:[%s548 + $0x1f8] sm:$0xff]
  %v613 = vpack.c.bf16 %v551, %v549
  %v614 = vpack.c.bf16 %v552, %v550
  %v615 = vpack.c.bf16 %v555, %v553
  %v616 = vpack.c.bf16 %v556, %v554
  %v617 = vpack.c.bf16 %v559, %v557
  %v618 = vpack.c.bf16 %v560, %v558
  %v619 = vpack.c.bf16 %v563, %v561
  %v620 = vpack.c.bf16 %v564, %v562
  %v621 = vpack.c.bf16 %v567, %v565
  %v622 = vpack.c.bf16 %v568, %v566
  %v623 = vpack.c.bf16 %v571, %v569
  %v624 = vpack.c.bf16 %v572, %v570
  %v625 = vpack.c.bf16 %v575, %v573
  %v626 = vpack.c.bf16 %v576, %v574
  %v627 = vpack.c.bf16 %v579, %v577
  %v628 = vpack.c.bf16 %v580, %v578
  %v629 = vpack.c.bf16 %v583, %v581
  %v630 = vpack.c.bf16 %v584, %v582
  %v631 = vpack.c.bf16 %v587, %v585
  %v632 = vpack.c.bf16 %v588, %v586
  %v633 = vpack.c.bf16 %v591, %v589
  %v634 = vpack.c.bf16 %v592, %v590
  %v635 = vpack.c.bf16 %v595, %v593
  %v636 = vpack.c.bf16 %v596, %v594
  %v637 = vpack.c.bf16 %v599, %v597
  %v638 = vpack.c.bf16 %v600, %v598
  %v639 = vpack.c.bf16 %v603, %v601
  %v640 = vpack.c.bf16 %v604, %v602
  %v641 = vpack.c.bf16 %v607, %v605
  %v642 = vpack.c.bf16 %v608, %v606
  %v643 = vpack.c.bf16 %v611, %v609
  %v644 = vpack.c.bf16 %v612, %v610
  %645 = vst [vmem:[#allocation1] ss:$9 sm:$0xff] %v21
  %v646 = vld [vmem:[#allocation1] sm:$0xff]
  %v647 = vld [vmem:[#allocation1 + $0x9] sm:$0xff]
  %650 = vmatpush.bf16.msra.mxu0 %v627
  %651 = vmatpush.bf16.msra.mxu0 %v625
  %652 = vmatpush.bf16.msra.mxu0 %v623
  %653 = vmatpush.bf16.msra.mxu0 %v621
  %654 = vmatpush.bf16.msra.mxu0 %v619
  %655 = vmatpush.bf16.msra.mxu0 %v617
  %656 = vmatpush.bf16.msra.mxu0 %v615
  %657 = vmatpush.bf16.msra.mxu0 %v613
  %658 = vmatmul.bf16.gmra.mxu0 %v646
  %v659 = vpop.f32.mrf.mxu0
  %v660 = vadd.f32 %v122, %v659
  %v661 = vpop.f32.mrf.mxu0
  %662 = vdwg.mxu0
  %663 = vmatpush.bf16.msra.mxu0 %v643
  %664 = vmatpush.bf16.msra.mxu0 %v641
  %665 = vmatpush.bf16.msra.mxu0 %v639
  %666 = vmatpush.bf16.msra.mxu0 %v637
  %667 = vmatpush.bf16.msra.mxu0 %v635
  %668 = vmatpush.bf16.msra.mxu0 %v633
  %669 = vmatpush.bf16.msra.mxu0 %v631
  %670 = vmatpush.bf16.msra.mxu0 %v629
  %671 = vmatmul.bf16.gmra.mxu0 %v647
  %v672 = vpop.f32.mrf.mxu0
  %v673 = vadd.f32 %v660, %v672
  %v674 = vpop.f32.mrf.mxu0
  %675 = vdwg.mxu0
  %676 = vmatpush.bf16.msra.mxu0 %v628
  %677 = vmatpush.bf16.msra.mxu0 %v626
  %678 = vmatpush.bf16.msra.mxu0 %v624
  %679 = vmatpush.bf16.msra.mxu0 %v622
  %680 = vmatpush.bf16.msra.mxu0 %v620
  %681 = vmatpush.bf16.msra.mxu0 %v618
  %682 = vmatpush.bf16.msra.mxu0 %v616
  %683 = vmatpush.bf16.msra.mxu0 %v614
  %684 = vmatmul.bf16.gmra.mxu0 %v646
  %v685 = vpop.f32.mrf.mxu0
  %v686 = vadd.f32 %v122, %v685
  %v687 = vpop.f32.mrf.mxu0
  %688 = vdwg.mxu0
  %689 = vmatpush.bf16.msra.mxu0 %v644
  %690 = vmatpush.bf16.msra.mxu0 %v642
  %691 = vmatpush.bf16.msra.mxu0 %v640
  %692 = vmatpush.bf16.msra.mxu0 %v638
  %693 = vmatpush.bf16.msra.mxu0 %v636
  %694 = vmatpush.bf16.msra.mxu0 %v634
  %695 = vmatpush.bf16.msra.mxu0 %v632
  %696 = vmatpush.bf16.msra.mxu0 %v630
  %697 = vmatmul.bf16.gmra.mxu0 %v647
  %v698 = vpop.f32.mrf.mxu0
  %v699 = vadd.f32 %v686, %v698
  %v700 = vpop.f32.mrf.mxu0
  %701 = vdwg.mxu0
  %v702 = vmax.f32 %v673, 0.0
  %v703 = vmax.f32 %v699, 0.0
  %v706 = vrot.slane %v703, 7
  %v707 = vsel %vm187, %v702, %v706
  %s709 = scalar_lea.vmem [#allocation2], 3
  %710 = vst.msk [vmem:[%s709] ss:$8 sm:$0x3] %vm193, %v707
  %711 = vst.msk [vmem:[%s709] ss:$8 sm:$0x0] %vm193, %v707
  %712 = vst [vmem:[#allocation1] sm:$0xff] %v702
  %713 = vst [vmem:[#allocation1 + $0x9] sm:$0xff] %v703
  %s714 = scalar_lea.vmem [#allocation1], 1
  %v715 = vld [vmem:[%s714] ss:$9 sm:$0xff]
  %s717 = scalar_lea.vmem %s201, 3 [#allocation2]
  %718 = vst.msk [vmem:[%s717] ss:$8 sm:$0x3] %vm193, %v715
  %719 = vst.msk [vmem:[%s717] ss:$8 sm:$0x0] %vm193, %v715
  %s720 = scalar_lea.vmem %s0, 2048
  %v721 = vld [vmem:[%s720] sm:$0xff]
  %v722 = vld [vmem:[%s720 + $0x8] sm:$0xff]
  %v723 = vld [vmem:[%s720 + $0x10] sm:$0xff]
  %v724 = vld [vmem:[%s720 + $0x18] sm:$0xff]
  %v725 = vld [vmem:[%s720 + $0x20] sm:$0xff]
  %v726 = vld [vmem:[%s720 + $0x28] sm:$0xff]
  %v727 = vld [vmem:[%s720 + $0x30] sm:$0xff]
  %v728 = vld [vmem:[%s720 + $0x38] sm:$0xff]
  %v729 = vld [vmem:[%s720 + $0x40] sm:$0xff]
  %v730 = vld [vmem:[%s720 + $0x48] sm:$0xff]
  %v731 = vld [vmem:[%s720 + $0x50] sm:$0xff]
  %v732 = vld [vmem:[%s720 + $0x58] sm:$0xff]
  %v733 = vld [vmem:[%s720 + $0x60] sm:$0xff]
  %v734 = vld [vmem:[%s720 + $0x68] sm:$0xff]
  %v735 = vld [vmem:[%s720 + $0x70] sm:$0xff]
  %v736 = vld [vmem:[%s720 + $0x78] sm:$0xff]
  %v737 = vld [vmem:[%s720 + $0x80] sm:$0xff]
  %v738 = vld [vmem:[%s720 + $0x88] sm:$0xff]
  %v739 = vld [vmem:[%s720 + $0x90] sm:$0xff]
  %v740 = vld [vmem:[%s720 + $0x98] sm:$0xff]
  %v741 = vld [vmem:[%s720 + $0xa0] sm:$0xff]
  %v742 = vld [vmem:[%s720 + $0xa8] sm:$0xff]
  %v743 = vld [vmem:[%s720 + $0xb0] sm:$0xff]
  %v744 = vld [vmem:[%s720 + $0xb8] sm:$0xff]
  %v745 = vld [vmem:[%s720 + $0xc0] sm:$0xff]
  %v746 = vld [vmem:[%s720 + $0xc8] sm:$0xff]
  %v747 = vld [vmem:[%s720 + $0xd0] sm:$0xff]
  %v748 = vld [vmem:[%s720 + $0xd8] sm:$0xff]
  %v749 = vld [vmem:[%s720 + $0xe0] sm:$0xff]
  %v750 = vld [vmem:[%s720 + $0xe8] sm:$0xff]
  %v751 = vld [vmem:[%s720 + $0xf0] sm:$0xff]
  %v752 = vld [vmem:[%s720 + $0xf8] sm:$0xff]
  %v753 = vld [vmem:[%s720 + $0x100] sm:$0xff]
  %v754 = vld [vmem:[%s720 + $0x108] sm:$0xff]
  %v755 = vld [vmem:[%s720 + $0x110] sm:$0xff]
  %v756 = vld [vmem:[%s720 + $0x118] sm:$0xff]
  %v757 = vld [vmem:[%s720 + $0x120] sm:$0xff]
  %v758 = vld [vmem:[%s720 + $0x128] sm:$0xff]
  %v759 = vld [vmem:[%s720 + $0x130] sm:$0xff]
  %v760 = vld [vmem:[%s720 + $0x138] sm:$0xff]
  %v761 = vld [vmem:[%s720 + $0x140] sm:$0xff]
  %v762 = vld [vmem:[%s720 + $0x148] sm:$0xff]
  %v763 = vld [vmem:[%s720 + $0x150] sm:$0xff]
  %v764 = vld [vmem:[%s720 + $0x158] sm:$0xff]
  %v765 = vld [vmem:[%s720 + $0x160] sm:$0xff]
  %v766 = vld [vmem:[%s720 + $0x168] sm:$0xff]
  %v767 = vld [vmem:[%s720 + $0x170] sm:$0xff]
  %v768 = vld [vmem:[%s720 + $0x178] sm:$0xff]
  %v769 = vld [vmem:[%s720 + $0x180] sm:$0xff]
  %v770 = vld [vmem:[%s720 + $0x188] sm:$0xff]
  %v771 = vld [vmem:[%s720 + $0x190] sm:$0xff]
  %v772 = vld [vmem:[%s720 + $0x198] sm:$0xff]
  %v773 = vld [vmem:[%s720 + $0x1a0] sm:$0xff]
  %v774 = vld [vmem:[%s720 + $0x1a8] sm:$0xff]
  %v775 = vld [vmem:[%s720 + $0x1b0] sm:$0xff]
  %v776 = vld [vmem:[%s720 + $0x1b8] sm:$0xff]
  %v777 = vld [vmem:[%s720 + $0x1c0] sm:$0xff]
  %v778 = vld [vmem:[%s720 + $0x1c8] sm:$0xff]
  %v779 = vld [vmem:[%s720 + $0x1d0] sm:$0xff]
  %v780 = vld [vmem:[%s720 + $0x1d8] sm:$0xff]
  %v781 = vld [vmem:[%s720 + $0x1e0] sm:$0xff]
  %v782 = vld [vmem:[%s720 + $0x1e8] sm:$0xff]
  %v783 = vld [vmem:[%s720 + $0x1f0] sm:$0xff]
  %v784 = vld [vmem:[%s720 + $0x1f8] sm:$0xff]
  %v785 = vpack.c.bf16 %v723, %v721
  %v786 = vpack.c.bf16 %v724, %v722
  %v787 = vpack.c.bf16 %v727, %v725
  %v788 = vpack.c.bf16 %v728, %v726
  %v789 = vpack.c.bf16 %v731, %v729
  %v790 = vpack.c.bf16 %v732, %v730
  %v791 = vpack.c.bf16 %v735, %v733
  %v792 = vpack.c.bf16 %v736, %v734
  %v793 = vpack.c.bf16 %v739, %v737
  %v794 = vpack.c.bf16 %v740, %v738
  %v795 = vpack.c.bf16 %v743, %v741
  %v796 = vpack.c.bf16 %v744, %v742
  %v797 = vpack.c.bf16 %v747, %v745
  %v798 = vpack.c.bf16 %v748, %v746
  %v799 = vpack.c.bf16 %v751, %v749
  %v800 = vpack.c.bf16 %v752, %v750
  %v801 = vpack.c.bf16 %v755, %v753
  %v802 = vpack.c.bf16 %v756, %v754
  %v803 = vpack.c.bf16 %v759, %v757
  %v804 = vpack.c.bf16 %v760, %v758
  %v805 = vpack.c.bf16 %v763, %v761
  %v806 = vpack.c.bf16 %v764, %v762
  %v807 = vpack.c.bf16 %v767, %v765
  %v808 = vpack.c.bf16 %v768, %v766
  %v809 = vpack.c.bf16 %v771, %v769
  %v810 = vpack.c.bf16 %v772, %v770
  %v811 = vpack.c.bf16 %v775, %v773
  %v812 = vpack.c.bf16 %v776, %v774
  %v813 = vpack.c.bf16 %v779, %v777
  %v814 = vpack.c.bf16 %v780, %v778
  %v815 = vpack.c.bf16 %v783, %v781
  %v816 = vpack.c.bf16 %v784, %v782
  %817 = vst [vmem:[#allocation1] ss:$9 sm:$0xff] %v21
  %v818 = vld [vmem:[#allocation1] sm:$0xff]
  %v819 = vld [vmem:[#allocation1 + $0x9] sm:$0xff]
  %822 = vmatpush.bf16.msra.mxu0 %v799
  %823 = vmatpush.bf16.msra.mxu0 %v797
  %824 = vmatpush.bf16.msra.mxu0 %v795
  %825 = vmatpush.bf16.msra.mxu0 %v793
  %826 = vmatpush.bf16.msra.mxu0 %v791
  %827 = vmatpush.bf16.msra.mxu0 %v789
  %828 = vmatpush.bf16.msra.mxu0 %v787
  %829 = vmatpush.bf16.msra.mxu0 %v785
  %830 = vmatmul.bf16.gmra.mxu0 %v818
  %v831 = vpop.f32.mrf.mxu0
  %v832 = vadd.f32 %v122, %v831
  %v833 = vpop.f32.mrf.mxu0
  %834 = vdwg.mxu0
  %835 = vmatpush.bf16.msra.mxu0 %v815
  %836 = vmatpush.bf16.msra.mxu0 %v813
  %837 = vmatpush.bf16.msra.mxu0 %v811
  %838 = vmatpush.bf16.msra.mxu0 %v809
  %839 = vmatpush.bf16.msra.mxu0 %v807
  %840 = vmatpush.bf16.msra.mxu0 %v805
  %841 = vmatpush.bf16.msra.mxu0 %v803
  %842 = vmatpush.bf16.msra.mxu0 %v801
  %843 = vmatmul.bf16.gmra.mxu0 %v819
  %v844 = vpop.f32.mrf.mxu0
  %v845 = vadd.f32 %v832, %v844
  %v846 = vpop.f32.mrf.mxu0
  %847 = vdwg.mxu0
  %848 = vmatpush.bf16.msra.mxu0 %v800
  %849 = vmatpush.bf16.msra.mxu0 %v798
  %850 = vmatpush.bf16.msra.mxu0 %v796
  %851 = vmatpush.bf16.msra.mxu0 %v794
  %852 = vmatpush.bf16.msra.mxu0 %v792
  %853 = vmatpush.bf16.msra.mxu0 %v790
  %854 = vmatpush.bf16.msra.mxu0 %v788
  %855 = vmatpush.bf16.msra.mxu0 %v786
  %856 = vmatmul.bf16.gmra.mxu0 %v818
  %v857 = vpop.f32.mrf.mxu0
  %v858 = vadd.f32 %v122, %v857
  %v859 = vpop.f32.mrf.mxu0
  %860 = vdwg.mxu0
  %861 = vmatpush.bf16.msra.mxu0 %v816
  %862 = vmatpush.bf16.msra.mxu0 %v814
  %863 = vmatpush.bf16.msra.mxu0 %v812
  %864 = vmatpush.bf16.msra.mxu0 %v810
  %865 = vmatpush.bf16.msra.mxu0 %v808
  %866 = vmatpush.bf16.msra.mxu0 %v806
  %867 = vmatpush.bf16.msra.mxu0 %v804
  %868 = vmatpush.bf16.msra.mxu0 %v802
  %869 = vmatmul.bf16.gmra.mxu0 %v819
  %v870 = vpop.f32.mrf.mxu0
  %v871 = vadd.f32 %v858, %v870
  %v872 = vpop.f32.mrf.mxu0
  %873 = vdwg.mxu0
  %v874 = vmax.f32 %v845, 0.0
  %v875 = vmax.f32 %v871, 0.0
  %v878 = vrot.slane %v875, 7
  %v879 = vsel %vm187, %v874, %v878
  %s881 = scalar_lea.vmem [#allocation2], 4
  %882 = vst.msk [vmem:[%s881] ss:$8 sm:$0x3] %vm193, %v879
  %883 = vst.msk [vmem:[%s881] ss:$8 sm:$0x0] %vm193, %v879
  %884 = vst [vmem:[#allocation1] sm:$0xff] %v874
  %885 = vst [vmem:[#allocation1 + $0x9] sm:$0xff] %v875
  %s886 = scalar_lea.vmem [#allocation1], 1
  %v887 = vld [vmem:[%s886] ss:$9 sm:$0xff]
  %s889 = scalar_lea.vmem %s201, 4 [#allocation2]
  %890 = vst.msk [vmem:[%s889] ss:$8 sm:$0x3] %vm193, %v887
  %891 = vst.msk [vmem:[%s889] ss:$8 sm:$0x0] %vm193, %v887
  %s892 = scalar_lea.vmem %s0, 2560
  %v893 = vld [vmem:[%s892] sm:$0xff]
  %v894 = vld [vmem:[%s892 + $0x8] sm:$0xff]
  %v895 = vld [vmem:[%s892 + $0x10] sm:$0xff]
  %v896 = vld [vmem:[%s892 + $0x18] sm:$0xff]
  %v897 = vld [vmem:[%s892 + $0x20] sm:$0xff]
  %v898 = vld [vmem:[%s892 + $0x28] sm:$0xff]
  %v899 = vld [vmem:[%s892 + $0x30] sm:$0xff]
  %v900 = vld [vmem:[%s892 + $0x38] sm:$0xff]
  %v901 = vld [vmem:[%s892 + $0x40] sm:$0xff]
  %v902 = vld [vmem:[%s892 + $0x48] sm:$0xff]
  %v903 = vld [vmem:[%s892 + $0x50] sm:$0xff]
  %v904 = vld [vmem:[%s892 + $0x58] sm:$0xff]
  %v905 = vld [vmem:[%s892 + $0x60] sm:$0xff]
  %v906 = vld [vmem:[%s892 + $0x68] sm:$0xff]
  %v907 = vld [vmem:[%s892 + $0x70] sm:$0xff]
  %v908 = vld [vmem:[%s892 + $0x78] sm:$0xff]
  %v909 = vld [vmem:[%s892 + $0x80] sm:$0xff]
  %v910 = vld [vmem:[%s892 + $0x88] sm:$0xff]
  %v911 = vld [vmem:[%s892 + $0x90] sm:$0xff]
  %v912 = vld [vmem:[%s892 + $0x98] sm:$0xff]
  %v913 = vld [vmem:[%s892 + $0xa0] sm:$0xff]
  %v914 = vld [vmem:[%s892 + $0xa8] sm:$0xff]
  %v915 = vld [vmem:[%s892 + $0xb0] sm:$0xff]
  %v916 = vld [vmem:[%s892 + $0xb8] sm:$0xff]
  %v917 = vld [vmem:[%s892 + $0xc0] sm:$0xff]
  %v918 = vld [vmem:[%s892 + $0xc8] sm:$0xff]
  %v919 = vld [vmem:[%s892 + $0xd0] sm:$0xff]
  %v920 = vld [vmem:[%s892 + $0xd8] sm:$0xff]
  %v921 = vld [vmem:[%s892 + $0xe0] sm:$0xff]
  %v922 = vld [vmem:[%s892 + $0xe8] sm:$0xff]
  %v923 = vld [vmem:[%s892 + $0xf0] sm:$0xff]
  %v924 = vld [vmem:[%s892 + $0xf8] sm:$0xff]
  %v925 = vld [vmem:[%s892 + $0x100] sm:$0xff]
  %v926 = vld [vmem:[%s892 + $0x108] sm:$0xff]
  %v927 = vld [vmem:[%s892 + $0x110] sm:$0xff]
  %v928 = vld [vmem:[%s892 + $0x118] sm:$0xff]
  %v929 = vld [vmem:[%s892 + $0x120] sm:$0xff]
  %v930 = vld [vmem:[%s892 + $0x128] sm:$0xff]
  %v931 = vld [vmem:[%s892 + $0x130] sm:$0xff]
  %v932 = vld [vmem:[%s892 + $0x138] sm:$0xff]
  %v933 = vld [vmem:[%s892 + $0x140] sm:$0xff]
  %v934 = vld [vmem:[%s892 + $0x148] sm:$0xff]
  %v935 = vld [vmem:[%s892 + $0x150] sm:$0xff]
  %v936 = vld [vmem:[%s892 + $0x158] sm:$0xff]
  %v937 = vld [vmem:[%s892 + $0x160] sm:$0xff]
  %v938 = vld [vmem:[%s892 + $0x168] sm:$0xff]
  %v939 = vld [vmem:[%s892 + $0x170] sm:$0xff]
  %v940 = vld [vmem:[%s892 + $0x178] sm:$0xff]
  %v941 = vld [vmem:[%s892 + $0x180] sm:$0xff]
  %v942 = vld [vmem:[%s892 + $0x188] sm:$0xff]
  %v943 = vld [vmem:[%s892 + $0x190] sm:$0xff]
  %v944 = vld [vmem:[%s892 + $0x198] sm:$0xff]
  %v945 = vld [vmem:[%s892 + $0x1a0] sm:$0xff]
  %v946 = vld [vmem:[%s892 + $0x1a8] sm:$0xff]
  %v947 = vld [vmem:[%s892 + $0x1b0] sm:$0xff]
  %v948 = vld [vmem:[%s892 + $0x1b8] sm:$0xff]
  %v949 = vld [vmem:[%s892 + $0x1c0] sm:$0xff]
  %v950 = vld [vmem:[%s892 + $0x1c8] sm:$0xff]
  %v951 = vld [vmem:[%s892 + $0x1d0] sm:$0xff]
  %v952 = vld [vmem:[%s892 + $0x1d8] sm:$0xff]
  %v953 = vld [vmem:[%s892 + $0x1e0] sm:$0xff]
  %v954 = vld [vmem:[%s892 + $0x1e8] sm:$0xff]
  %v955 = vld [vmem:[%s892 + $0x1f0] sm:$0xff]
  %v956 = vld [vmem:[%s892 + $0x1f8] sm:$0xff]
  %v957 = vpack.c.bf16 %v895, %v893
  %v958 = vpack.c.bf16 %v896, %v894
  %v959 = vpack.c.bf16 %v899, %v897
  %v960 = vpack.c.bf16 %v900, %v898
  %v961 = vpack.c.bf16 %v903, %v901
  %v962 = vpack.c.bf16 %v904, %v902
  %v963 = vpack.c.bf16 %v907, %v905
  %v964 = vpack.c.bf16 %v908, %v906
  %v965 = vpack.c.bf16 %v911, %v909
  %v966 = vpack.c.bf16 %v912, %v910
  %v967 = vpack.c.bf16 %v915, %v913
  %v968 = vpack.c.bf16 %v916, %v914
  %v969 = vpack.c.bf16 %v919, %v917
  %v970 = vpack.c.bf16 %v920, %v918
  %v971 = vpack.c.bf16 %v923, %v921
  %v972 = vpack.c.bf16 %v924, %v922
  %v973 = vpack.c.bf16 %v927, %v925
  %v974 = vpack.c.bf16 %v928, %v926
  %v975 = vpack.c.bf16 %v931, %v929
  %v976 = vpack.c.bf16 %v932, %v930
  %v977 = vpack.c.bf16 %v935, %v933
  %v978 = vpack.c.bf16 %v936, %v934
  %v979 = vpack.c.bf16 %v939, %v937
  %v980 = vpack.c.bf16 %v940, %v938
  %v981 = vpack.c.bf16 %v943, %v941
  %v982 = vpack.c.bf16 %v944, %v942
  %v983 = vpack.c.bf16 %v947, %v945
  %v984 = vpack.c.bf16 %v948, %v946
  %v985 = vpack.c.bf16 %v951, %v949
  %v986 = vpack.c.bf16 %v952, %v950
  %v987 = vpack.c.bf16 %v955, %v953
  %v988 = vpack.c.bf16 %v956, %v954
  %989 = vst [vmem:[#allocation1] ss:$9 sm:$0xff] %v21
  %v990 = vld [vmem:[#allocation1] sm:$0xff]
  %v991 = vld [vmem:[#allocation1 + $0x9] sm:$0xff]
  %994 = vmatpush.bf16.msra.mxu0 %v971
  %995 = vmatpush.bf16.msra.mxu0 %v969
  %996 = vmatpush.bf16.msra.mxu0 %v967
  %997 = vmatpush.bf16.msra.mxu0 %v965
  %998 = vmatpush.bf16.msra.mxu0 %v963
  %999 = vmatpush.bf16.msra.mxu0 %v961
  %1000 = vmatpush.bf16.msra.mxu0 %v959
  %1001 = vmatpush.bf16.msra.mxu0 %v957
  %1002 = vmatmul.bf16.gmra.mxu0 %v990
  %v1003 = vpop.f32.mrf.mxu0
  %v1004 = vadd.f32 %v122, %v1003
  %v1005 = vpop.f32.mrf.mxu0
  %1006 = vdwg.mxu0
  %1007 = vmatpush.bf16.msra.mxu0 %v987
  %1008 = vmatpush.bf16.msra.mxu0 %v985
  %1009 = vmatpush.bf16.msra.mxu0 %v983
  %1010 = vmatpush.bf16.msra.mxu0 %v981
  %1011 = vmatpush.bf16.msra.mxu0 %v979
  %1012 = vmatpush.bf16.msra.mxu0 %v977
  %1013 = vmatpush.bf16.msra.mxu0 %v975
  %1014 = vmatpush.bf16.msra.mxu0 %v973
  %1015 = vmatmul.bf16.gmra.mxu0 %v991
  %v1016 = vpop.f32.mrf.mxu0
  %v1017 = vadd.f32 %v1004, %v1016
  %v1018 = vpop.f32.mrf.mxu0
  %1019 = vdwg.mxu0
  %1020 = vmatpush.bf16.msra.mxu0 %v972
  %1021 = vmatpush.bf16.msra.mxu0 %v970
  %1022 = vmatpush.bf16.msra.mxu0 %v968
  %1023 = vmatpush.bf16.msra.mxu0 %v966
  %1024 = vmatpush.bf16.msra.mxu0 %v964
  %1025 = vmatpush.bf16.msra.mxu0 %v962
  %1026 = vmatpush.bf16.msra.mxu0 %v960
  %1027 = vmatpush.bf16.msra.mxu0 %v958
  %1028 = vmatmul.bf16.gmra.mxu0 %v990
  %v1029 = vpop.f32.mrf.mxu0
  %v1030 = vadd.f32 %v122, %v1029
  %v1031 = vpop.f32.mrf.mxu0
  %1032 = vdwg.mxu0
  %1033 = vmatpush.bf16.msra.mxu0 %v988
  %1034 = vmatpush.bf16.msra.mxu0 %v986
  %1035 = vmatpush.bf16.msra.mxu0 %v984
  %1036 = vmatpush.bf16.msra.mxu0 %v982
  %1037 = vmatpush.bf16.msra.mxu0 %v980
  %1038 = vmatpush.bf16.msra.mxu0 %v978
  %1039 = vmatpush.bf16.msra.mxu0 %v976
  %1040 = vmatpush.bf16.msra.mxu0 %v974
  %1041 = vmatmul.bf16.gmra.mxu0 %v991
  %v1042 = vpop.f32.mrf.mxu0
  %v1043 = vadd.f32 %v1030, %v1042
  %v1044 = vpop.f32.mrf.mxu0
  %1045 = vdwg.mxu0
  %v1046 = vmax.f32 %v1017, 0.0
  %v1047 = vmax.f32 %v1043, 0.0
  %v1050 = vrot.slane %v1047, 7
  %v1051 = vsel %vm187, %v1046, %v1050
  %s1053 = scalar_lea.vmem [#allocation2], 5
  %1054 = vst.msk [vmem:[%s1053] ss:$8 sm:$0x3] %vm193, %v1051
  %1055 = vst.msk [vmem:[%s1053] ss:$8 sm:$0x0] %vm193, %v1051
  %1056 = vst [vmem:[#allocation1] sm:$0xff] %v1046
  %1057 = vst [vmem:[#allocation1 + $0x9] sm:$0xff] %v1047
  %s1058 = scalar_lea.vmem [#allocation1], 1
  %v1059 = vld [vmem:[%s1058] ss:$9 sm:$0xff]
  %s1061 = scalar_lea.vmem %s201, 5 [#allocation2]
  %1062 = vst.msk [vmem:[%s1061] ss:$8 sm:$0x3] %vm193, %v1059
  %1063 = vst.msk [vmem:[%s1061] ss:$8 sm:$0x0] %vm193, %v1059
  %s1064 = scalar_lea.vmem %s0, 3072
  %v1065 = vld [vmem:[%s1064] sm:$0xff]
  %v1066 = vld [vmem:[%s1064 + $0x8] sm:$0xff]
  %v1067 = vld [vmem:[%s1064 + $0x10] sm:$0xff]
  %v1068 = vld [vmem:[%s1064 + $0x18] sm:$0xff]
  %v1069 = vld [vmem:[%s1064 + $0x20] sm:$0xff]
  %v1070 = vld [vmem:[%s1064 + $0x28] sm:$0xff]
  %v1071 = vld [vmem:[%s1064 + $0x30] sm:$0xff]
  %v1072 = vld [vmem:[%s1064 + $0x38] sm:$0xff]
  %v1073 = vld [vmem:[%s1064 + $0x40] sm:$0xff]
  %v1074 = vld [vmem:[%s1064 + $0x48] sm:$0xff]
  %v1075 = vld [vmem:[%s1064 + $0x50] sm:$0xff]
  %v1076 = vld [vmem:[%s1064 + $0x58] sm:$0xff]
  %v1077 = vld [vmem:[%s1064 + $0x60] sm:$0xff]
  %v1078 = vld [vmem:[%s1064 + $0x68] sm:$0xff]
  %v1079 = vld [vmem:[%s1064 + $0x70] sm:$0xff]
  %v1080 = vld [vmem:[%s1064 + $0x78] sm:$0xff]
  %v1081 = vld [vmem:[%s1064 + $0x80] sm:$0xff]
  %v1082 = vld [vmem:[%s1064 + $0x88] sm:$0xff]
  %v1083 = vld [vmem:[%s1064 + $0x90] sm:$0xff]
  %v1084 = vld [vmem:[%s1064 + $0x98] sm:$0xff]
  %v1085 = vld [vmem:[%s1064 + $0xa0] sm:$0xff]
  %v1086 = vld [vmem:[%s1064 + $0xa8] sm:$0xff]
  %v1087 = vld [vmem:[%s1064 + $0xb0] sm:$0xff]
  %v1088 = vld [vmem:[%s1064 + $0xb8] sm:$0xff]
  %v1089 = vld [vmem:[%s1064 + $0xc0] sm:$0xff]
  %v1090 = vld [vmem:[%s1064 + $0xc8] sm:$0xff]
  %v1091 = vld [vmem:[%s1064 + $0xd0] sm:$0xff]
  %v1092 = vld [vmem:[%s1064 + $0xd8] sm:$0xff]
  %v1093 = vld [vmem:[%s1064 + $0xe0] sm:$0xff]
  %v1094 = vld [vmem:[%s1064 + $0xe8] sm:$0xff]
  %v1095 = vld [vmem:[%s1064 + $0xf0] sm:$0xff]
  %v1096 = vld [vmem:[%s1064 + $0xf8] sm:$0xff]
  %v1097 = vld [vmem:[%s1064 + $0x100] sm:$0xff]
  %v1098 = vld [vmem:[%s1064 + $0x108] sm:$0xff]
  %v1099 = vld [vmem:[%s1064 + $0x110] sm:$0xff]
  %v1100 = vld [vmem:[%s1064 + $0x118] sm:$0xff]
  %v1101 = vld [vmem:[%s1064 + $0x120] sm:$0xff]
  %v1102 = vld [vmem:[%s1064 + $0x128] sm:$0xff]
  %v1103 = vld [vmem:[%s1064 + $0x130] sm:$0xff]
  %v1104 = vld [vmem:[%s1064 + $0x138] sm:$0xff]
  %v1105 = vld [vmem:[%s1064 + $0x140] sm:$0xff]
  %v1106 = vld [vmem:[%s1064 + $0x148] sm:$0xff]
  %v1107 = vld [vmem:[%s1064 + $0x150] sm:$0xff]
  %v1108 = vld [vmem:[%s1064 + $0x158] sm:$0xff]
  %v1109 = vld [vmem:[%s1064 + $0x160] sm:$0xff]
  %v1110 = vld [vmem:[%s1064 + $0x168] sm:$0xff]
  %v1111 = vld [vmem:[%s1064 + $0x170] sm:$0xff]
  %v1112 = vld [vmem:[%s1064 + $0x178] sm:$0xff]
  %v1113 = vld [vmem:[%s1064 + $0x180] sm:$0xff]
  %v1114 = vld [vmem:[%s1064 + $0x188] sm:$0xff]
  %v1115 = vld [vmem:[%s1064 + $0x190] sm:$0xff]
  %v1116 = vld [vmem:[%s1064 + $0x198] sm:$0xff]
  %v1117 = vld [vmem:[%s1064 + $0x1a0] sm:$0xff]
  %v1118 = vld [vmem:[%s1064 + $0x1a8] sm:$0xff]
  %v1119 = vld [vmem:[%s1064 + $0x1b0] sm:$0xff]
  %v1120 = vld [vmem:[%s1064 + $0x1b8] sm:$0xff]
  %v1121 = vld [vmem:[%s1064 + $0x1c0] sm:$0xff]
  %v1122 = vld [vmem:[%s1064 + $0x1c8] sm:$0xff]
  %v1123 = vld [vmem:[%s1064 + $0x1d0] sm:$0xff]
  %v1124 = vld [vmem:[%s1064 + $0x1d8] sm:$0xff]
  %v1125 = vld [vmem:[%s1064 + $0x1e0] sm:$0xff]
  %v1126 = vld [vmem:[%s1064 + $0x1e8] sm:$0xff]
  %v1127 = vld [vmem:[%s1064 + $0x1f0] sm:$0xff]
  %v1128 = vld [vmem:[%s1064 + $0x1f8] sm:$0xff]
  %v1129 = vpack.c.bf16 %v1067, %v1065
  %v1130 = vpack.c.bf16 %v1068, %v1066
  %v1131 = vpack.c.bf16 %v1071, %v1069
  %v1132 = vpack.c.bf16 %v1072, %v1070
  %v1133 = vpack.c.bf16 %v1075, %v1073
  %v1134 = vpack.c.bf16 %v1076, %v1074
  %v1135 = vpack.c.bf16 %v1079, %v1077
  %v1136 = vpack.c.bf16 %v1080, %v1078
  %v1137 = vpack.c.bf16 %v1083, %v1081
  %v1138 = vpack.c.bf16 %v1084, %v1082
  %v1139 = vpack.c.bf16 %v1087, %v1085
  %v1140 = vpack.c.bf16 %v1088, %v1086
  %v1141 = vpack.c.bf16 %v1091, %v1089
  %v1142 = vpack.c.bf16 %v1092, %v1090
  %v1143 = vpack.c.bf16 %v1095, %v1093
  %v1144 = vpack.c.bf16 %v1096, %v1094
  %v1145 = vpack.c.bf16 %v1099, %v1097
  %v1146 = vpack.c.bf16 %v1100, %v1098
  %v1147 = vpack.c.bf16 %v1103, %v1101
  %v1148 = vpack.c.bf16 %v1104, %v1102
  %v1149 = vpack.c.bf16 %v1107, %v1105
  %v1150 = vpack.c.bf16 %v1108, %v1106
  %v1151 = vpack.c.bf16 %v1111, %v1109
  %v1152 = vpack.c.bf16 %v1112, %v1110
  %v1153 = vpack.c.bf16 %v1115, %v1113
  %v1154 = vpack.c.bf16 %v1116, %v1114
  %v1155 = vpack.c.bf16 %v1119, %v1117
  %v1156 = vpack.c.bf16 %v1120, %v1118
  %v1157 = vpack.c.bf16 %v1123, %v1121
  %v1158 = vpack.c.bf16 %v1124, %v1122
  %v1159 = vpack.c.bf16 %v1127, %v1125
  %v1160 = vpack.c.bf16 %v1128, %v1126
  %1161 = vst [vmem:[#allocation1] ss:$9 sm:$0xff] %v21
  %v1162 = vld [vmem:[#allocation1] sm:$0xff]
  %v1163 = vld [vmem:[#allocation1 + $0x9] sm:$0xff]
  %1166 = vmatpush.bf16.msra.mxu0 %v1143
  %1167 = vmatpush.bf16.msra.mxu0 %v1141
  %1168 = vmatpush.bf16.msra.mxu0 %v1139
  %1169 = vmatpush.bf16.msra.mxu0 %v1137
  %1170 = vmatpush.bf16.msra.mxu0 %v1135
  %1171 = vmatpush.bf16.msra.mxu0 %v1133
  %1172 = vmatpush.bf16.msra.mxu0 %v1131
  %1173 = vmatpush.bf16.msra.mxu0 %v1129
  %1174 = vmatmul.bf16.gmra.mxu0 %v1162
  %v1175 = vpop.f32.mrf.mxu0
  %v1176 = vadd.f32 %v122, %v1175
  %v1177 = vpop.f32.mrf.mxu0
  %1178 = vdwg.mxu0
  %1179 = vmatpush.bf16.msra.mxu0 %v1159
  %1180 = vmatpush.bf16.msra.mxu0 %v1157
  %1181 = vmatpush.bf16.msra.mxu0 %v1155
  %1182 = vmatpush.bf16.msra.mxu0 %v1153
  %1183 = vmatpush.bf16.msra.mxu0 %v1151
  %1184 = vmatpush.bf16.msra.mxu0 %v1149
  %1185 = vmatpush.bf16.msra.mxu0 %v1147
  %1186 = vmatpush.bf16.msra.mxu0 %v1145
  %1187 = vmatmul.bf16.gmra.mxu0 %v1163
  %v1188 = vpop.f32.mrf.mxu0
  %v1189 = vadd.f32 %v1176, %v1188
  %v1190 = vpop.f32.mrf.mxu0
  %1191 = vdwg.mxu0
  %1192 = vmatpush.bf16.msra.mxu0 %v1144
  %1193 = vmatpush.bf16.msra.mxu0 %v1142
  %1194 = vmatpush.bf16.msra.mxu0 %v1140
  %1195 = vmatpush.bf16.msra.mxu0 %v1138
  %1196 = vmatpush.bf16.msra.mxu0 %v1136
  %1197 = vmatpush.bf16.msra.mxu0 %v1134
  %1198 = vmatpush.bf16.msra.mxu0 %v1132
  %1199 = vmatpush.bf16.msra.mxu0 %v1130
  %1200 = vmatmul.bf16.gmra.mxu0 %v1162
  %v1201 = vpop.f32.mrf.mxu0
  %v1202 = vadd.f32 %v122, %v1201
  %v1203 = vpop.f32.mrf.mxu0
  %1204 = vdwg.mxu0
  %1205 = vmatpush.bf16.msra.mxu0 %v1160
  %1206 = vmatpush.bf16.msra.mxu0 %v1158
  %1207 = vmatpush.bf16.msra.mxu0 %v1156
  %1208 = vmatpush.bf16.msra.mxu0 %v1154
  %1209 = vmatpush.bf16.msra.mxu0 %v1152
  %1210 = vmatpush.bf16.msra.mxu0 %v1150
  %1211 = vmatpush.bf16.msra.mxu0 %v1148
  %1212 = vmatpush.bf16.msra.mxu0 %v1146
  %1213 = vmatmul.bf16.gmra.mxu0 %v1163
  %v1214 = vpop.f32.mrf.mxu0
  %v1215 = vadd.f32 %v1202, %v1214
  %v1216 = vpop.f32.mrf.mxu0
  %1217 = vdwg.mxu0
  %v1218 = vmax.f32 %v1189, 0.0
  %v1219 = vmax.f32 %v1215, 0.0
  %v1222 = vrot.slane %v1219, 7
  %v1223 = vsel %vm187, %v1218, %v1222
  %s1225 = scalar_lea.vmem [#allocation2], 6
  %1226 = vst.msk [vmem:[%s1225] ss:$8 sm:$0x3] %vm193, %v1223
  %1227 = vst.msk [vmem:[%s1225] ss:$8 sm:$0x0] %vm193, %v1223
  %1228 = vst [vmem:[#allocation1] sm:$0xff] %v1218
  %1229 = vst [vmem:[#allocation1 + $0x9] sm:$0xff] %v1219
  %s1230 = scalar_lea.vmem [#allocation1], 1
  %v1231 = vld [vmem:[%s1230] ss:$9 sm:$0xff]
  %s1233 = scalar_lea.vmem %s201, 6 [#allocation2]
  %1234 = vst.msk [vmem:[%s1233] ss:$8 sm:$0x3] %vm193, %v1231
  %1235 = vst.msk [vmem:[%s1233] ss:$8 sm:$0x0] %vm193, %v1231
  %s1236 = scalar_lea.vmem %s0, 3584
  %v1237 = vld [vmem:[%s1236] sm:$0xff]
  %v1238 = vld [vmem:[%s1236 + $0x8] sm:$0xff]
  %v1239 = vld [vmem:[%s1236 + $0x10] sm:$0xff]
  %v1240 = vld [vmem:[%s1236 + $0x18] sm:$0xff]
  %v1241 = vld [vmem:[%s1236 + $0x20] sm:$0xff]
  %v1242 = vld [vmem:[%s1236 + $0x28] sm:$0xff]
  %v1243 = vld [vmem:[%s1236 + $0x30] sm:$0xff]
  %v1244 = vld [vmem:[%s1236 + $0x38] sm:$0xff]
  %v1245 = vld [vmem:[%s1236 + $0x40] sm:$0xff]
  %v1246 = vld [vmem:[%s1236 + $0x48] sm:$0xff]
  %v1247 = vld [vmem:[%s1236 + $0x50] sm:$0xff]
  %v1248 = vld [vmem:[%s1236 + $0x58] sm:$0xff]
  %v1249 = vld [vmem:[%s1236 + $0x60] sm:$0xff]
  %v1250 = vld [vmem:[%s1236 + $0x68] sm:$0xff]
  %v1251 = vld [vmem:[%s1236 + $0x70] sm:$0xff]
  %v1252 = vld [vmem:[%s1236 + $0x78] sm:$0xff]
  %v1253 = vld [vmem:[%s1236 + $0x80] sm:$0xff]
  %v1254 = vld [vmem:[%s1236 + $0x88] sm:$0xff]
  %v1255 = vld [vmem:[%s1236 + $0x90] sm:$0xff]
  %v1256 = vld [vmem:[%s1236 + $0x98] sm:$0xff]
  %v1257 = vld [vmem:[%s1236 + $0xa0] sm:$0xff]
  %v1258 = vld [vmem:[%s1236 + $0xa8] sm:$0xff]
  %v1259 = vld [vmem:[%s1236 + $0xb0] sm:$0xff]
  %v1260 = vld [vmem:[%s1236 + $0xb8] sm:$0xff]
  %v1261 = vld [vmem:[%s1236 + $0xc0] sm:$0xff]
  %v1262 = vld [vmem:[%s1236 + $0xc8] sm:$0xff]
  %v1263 = vld [vmem:[%s1236 + $0xd0] sm:$0xff]
  %v1264 = vld [vmem:[%s1236 + $0xd8] sm:$0xff]
  %v1265 = vld [vmem:[%s1236 + $0xe0] sm:$0xff]
  %v1266 = vld [vmem:[%s1236 + $0xe8] sm:$0xff]
  %v1267 = vld [vmem:[%s1236 + $0xf0] sm:$0xff]
  %v1268 = vld [vmem:[%s1236 + $0xf8] sm:$0xff]
  %v1269 = vld [vmem:[%s1236 + $0x100] sm:$0xff]
  %v1270 = vld [vmem:[%s1236 + $0x108] sm:$0xff]
  %v1271 = vld [vmem:[%s1236 + $0x110] sm:$0xff]
  %v1272 = vld [vmem:[%s1236 + $0x118] sm:$0xff]
  %v1273 = vld [vmem:[%s1236 + $0x120] sm:$0xff]
  %v1274 = vld [vmem:[%s1236 + $0x128] sm:$0xff]
  %v1275 = vld [vmem:[%s1236 + $0x130] sm:$0xff]
  %v1276 = vld [vmem:[%s1236 + $0x138] sm:$0xff]
  %v1277 = vld [vmem:[%s1236 + $0x140] sm:$0xff]
  %v1278 = vld [vmem:[%s1236 + $0x148] sm:$0xff]
  %v1279 = vld [vmem:[%s1236 + $0x150] sm:$0xff]
  %v1280 = vld [vmem:[%s1236 + $0x158] sm:$0xff]
  %v1281 = vld [vmem:[%s1236 + $0x160] sm:$0xff]
  %v1282 = vld [vmem:[%s1236 + $0x168] sm:$0xff]
  %v1283 = vld [vmem:[%s1236 + $0x170] sm:$0xff]
  %v1284 = vld [vmem:[%s1236 + $0x178] sm:$0xff]
  %v1285 = vld [vmem:[%s1236 + $0x180] sm:$0xff]
  %v1286 = vld [vmem:[%s1236 + $0x188] sm:$0xff]
  %v1287 = vld [vmem:[%s1236 + $0x190] sm:$0xff]
  %v1288 = vld [vmem:[%s1236 + $0x198] sm:$0xff]
  %v1289 = vld [vmem:[%s1236 + $0x1a0] sm:$0xff]
  %v1290 = vld [vmem:[%s1236 + $0x1a8] sm:$0xff]
  %v1291 = vld [vmem:[%s1236 + $0x1b0] sm:$0xff]
  %v1292 = vld [vmem:[%s1236 + $0x1b8] sm:$0xff]
  %v1293 = vld [vmem:[%s1236 + $0x1c0] sm:$0xff]
  %v1294 = vld [vmem:[%s1236 + $0x1c8] sm:$0xff]
  %v1295 = vld [vmem:[%s1236 + $0x1d0] sm:$0xff]
  %v1296 = vld [vmem:[%s1236 + $0x1d8] sm:$0xff]
  %v1297 = vld [vmem:[%s1236 + $0x1e0] sm:$0xff]
  %v1298 = vld [vmem:[%s1236 + $0x1e8] sm:$0xff]
  %v1299 = vld [vmem:[%s1236 + $0x1f0] sm:$0xff]
  %v1300 = vld [vmem:[%s1236 + $0x1f8] sm:$0xff]
  %v1301 = vpack.c.bf16 %v1239, %v1237
  %v1302 = vpack.c.bf16 %v1240, %v1238
  %v1303 = vpack.c.bf16 %v1243, %v1241
  %v1304 = vpack.c.bf16 %v1244, %v1242
  %v1305 = vpack.c.bf16 %v1247, %v1245
  %v1306 = vpack.c.bf16 %v1248, %v1246
  %v1307 = vpack.c.bf16 %v1251, %v1249
  %v1308 = vpack.c.bf16 %v1252, %v1250
  %v1309 = vpack.c.bf16 %v1255, %v1253
  %v1310 = vpack.c.bf16 %v1256, %v1254
  %v1311 = vpack.c.bf16 %v1259, %v1257
  %v1312 = vpack.c.bf16 %v1260, %v1258
  %v1313 = vpack.c.bf16 %v1263, %v1261
  %v1314 = vpack.c.bf16 %v1264, %v1262
  %v1315 = vpack.c.bf16 %v1267, %v1265
  %v1316 = vpack.c.bf16 %v1268, %v1266
  %v1317 = vpack.c.bf16 %v1271, %v1269
  %v1318 = vpack.c.bf16 %v1272, %v1270
  %v1319 = vpack.c.bf16 %v1275, %v1273
  %v1320 = vpack.c.bf16 %v1276, %v1274
  %v1321 = vpack.c.bf16 %v1279, %v1277
  %v1322 = vpack.c.bf16 %v1280, %v1278
  %v1323 = vpack.c.bf16 %v1283, %v1281
  %v1324 = vpack.c.bf16 %v1284, %v1282
  %v1325 = vpack.c.bf16 %v1287, %v1285
  %v1326 = vpack.c.bf16 %v1288, %v1286
  %v1327 = vpack.c.bf16 %v1291, %v1289
  %v1328 = vpack.c.bf16 %v1292, %v1290
  %v1329 = vpack.c.bf16 %v1295, %v1293
  %v1330 = vpack.c.bf16 %v1296, %v1294
  %v1331 = vpack.c.bf16 %v1299, %v1297
  %v1332 = vpack.c.bf16 %v1300, %v1298
  %1333 = vst [vmem:[#allocation1] ss:$9 sm:$0xff] %v21
  %v1334 = vld [vmem:[#allocation1] sm:$0xff]
  %v1335 = vld [vmem:[#allocation1 + $0x9] sm:$0xff]
  %1338 = vmatpush.bf16.msra.mxu0 %v1315
  %1339 = vmatpush.bf16.msra.mxu0 %v1313
  %1340 = vmatpush.bf16.msra.mxu0 %v1311
  %1341 = vmatpush.bf16.msra.mxu0 %v1309
  %1342 = vmatpush.bf16.msra.mxu0 %v1307
  %1343 = vmatpush.bf16.msra.mxu0 %v1305
  %1344 = vmatpush.bf16.msra.mxu0 %v1303
  %1345 = vmatpush.bf16.msra.mxu0 %v1301
  %1346 = vmatmul.bf16.gmra.mxu0 %v1334
  %v1347 = vpop.f32.mrf.mxu0
  %v1348 = vadd.f32 %v122, %v1347
  %v1349 = vpop.f32.mrf.mxu0
  %1350 = vdwg.mxu0
  %1351 = vmatpush.bf16.msra.mxu0 %v1331
  %1352 = vmatpush.bf16.msra.mxu0 %v1329
  %1353 = vmatpush.bf16.msra.mxu0 %v1327
  %1354 = vmatpush.bf16.msra.mxu0 %v1325
  %1355 = vmatpush.bf16.msra.mxu0 %v1323
  %1356 = vmatpush.bf16.msra.mxu0 %v1321
  %1357 = vmatpush.bf16.msra.mxu0 %v1319
  %1358 = vmatpush.bf16.msra.mxu0 %v1317
  %1359 = vmatmul.bf16.gmra.mxu0 %v1335
  %v1360 = vpop.f32.mrf.mxu0
  %v1361 = vadd.f32 %v1348, %v1360
  %v1362 = vpop.f32.mrf.mxu0
  %1363 = vdwg.mxu0
  %1364 = vmatpush.bf16.msra.mxu0 %v1316
  %1365 = vmatpush.bf16.msra.mxu0 %v1314
  %1366 = vmatpush.bf16.msra.mxu0 %v1312
  %1367 = vmatpush.bf16.msra.mxu0 %v1310
  %1368 = vmatpush.bf16.msra.mxu0 %v1308
  %1369 = vmatpush.bf16.msra.mxu0 %v1306
  %1370 = vmatpush.bf16.msra.mxu0 %v1304
  %1371 = vmatpush.bf16.msra.mxu0 %v1302
  %1372 = vmatmul.bf16.gmra.mxu0 %v1334
  %v1373 = vpop.f32.mrf.mxu0
  %v1374 = vadd.f32 %v122, %v1373
  %v1375 = vpop.f32.mrf.mxu0
  %1376 = vdwg.mxu0
  %1377 = vmatpush.bf16.msra.mxu0 %v1332
  %1378 = vmatpush.bf16.msra.mxu0 %v1330
  %1379 = vmatpush.bf16.msra.mxu0 %v1328
  %1380 = vmatpush.bf16.msra.mxu0 %v1326
  %1381 = vmatpush.bf16.msra.mxu0 %v1324
  %1382 = vmatpush.bf16.msra.mxu0 %v1322
  %1383 = vmatpush.bf16.msra.mxu0 %v1320
  %1384 = vmatpush.bf16.msra.mxu0 %v1318
  %1385 = vmatmul.bf16.gmra.mxu0 %v1335
  %v1386 = vpop.f32.mrf.mxu0
  %v1387 = vadd.f32 %v1374, %v1386
  %v1388 = vpop.f32.mrf.mxu0
  %1389 = vdwg.mxu0
  %v1390 = vmax.f32 %v1361, 0.0
  %v1391 = vmax.f32 %v1387, 0.0
  %v1394 = vrot.slane %v1391, 7
  %v1395 = vsel %vm187, %v1390, %v1394
  %s1397 = scalar_lea.vmem [#allocation2], 7
  %1398 = vst.msk [vmem:[%s1397] ss:$8 sm:$0x3] %vm193, %v1395
  %1399 = vst.msk [vmem:[%s1397] ss:$8 sm:$0x0] %vm193, %v1395
  %1400 = vst [vmem:[#allocation1] sm:$0xff] %v1390
  %1401 = vst [vmem:[#allocation1 + $0x9] sm:$0xff] %v1391
  %s1402 = scalar_lea.vmem [#allocation1], 1
  %v1403 = vld [vmem:[%s1402] ss:$9 sm:$0xff]
  %s1405 = scalar_lea.vmem %s201, 7 [#allocation2]
  %1406 = vst.msk [vmem:[%s1405] ss:$8 sm:$0x3] %vm193, %v1403
  %1407 = vst.msk [vmem:[%s1405] ss:$8 sm:$0x0] %vm193, %v1403
  %v1408 = vld [vmem:[#allocation2] sm:$0xff]
  %v1409 = vld [vmem:[#allocation2 + $0x8] sm:$0xff]
  %v1410 = vpack.c.bf16 %v1408, %v1408
  %v1411 = vpack.c.bf16 %v1409, %v1409
  %v1412 = vld [vmem:[%s3] sm:$0xff]
  %v1413 = vld [vmem:[%s3 + $0x8] sm:$0xff]
  %v1414 = vld [vmem:[%s3 + $0x10] sm:$0xff]
  %v1415 = vld [vmem:[%s3 + $0x18] sm:$0xff]
  %v1416 = vld [vmem:[%s3 + $0x20] sm:$0xff]
  %v1417 = vld [vmem:[%s3 + $0x28] sm:$0xff]
  %v1418 = vld [vmem:[%s3 + $0x30] sm:$0xff]
  %v1419 = vld [vmem:[%s3 + $0x38] sm:$0xff]
  %v1420 = vld [vmem:[%s3 + $0x40] sm:$0xff]
  %v1421 = vld [vmem:[%s3 + $0x48] sm:$0xff]
  %v1422 = vld [vmem:[%s3 + $0x50] sm:$0xff]
  %v1423 = vld [vmem:[%s3 + $0x58] sm:$0xff]
  %v1424 = vld [vmem:[%s3 + $0x60] sm:$0xff]
  %v1425 = vld [vmem:[%s3 + $0x68] sm:$0xff]
  %v1426 = vld [vmem:[%s3 + $0x70] sm:$0xff]
  %v1427 = vld [vmem:[%s3 + $0x78] sm:$0xff]
  %v1428 = vld [vmem:[%s3 + $0x80] sm:$0xff]
  %v1429 = vld [vmem:[%s3 + $0x88] sm:$0xff]
  %v1430 = vld [vmem:[%s3 + $0x90] sm:$0xff]
  %v1431 = vld [vmem:[%s3 + $0x98] sm:$0xff]
  %v1432 = vld [vmem:[%s3 + $0xa0] sm:$0xff]
  %v1433 = vld [vmem:[%s3 + $0xa8] sm:$0x11]
  %v1434 = vld [vmem:[%s201] sm:$0xff]
  %v1435 = vld [vmem:[%s201 + $0x8] sm:$0xff]
  %v1436 = vpack.c.bf16 %v1434, %v1434
  %v1437 = vpack.c.bf16 %v1435, %v1435
  %s1438 = scalar_lea.vmem %s3, 176
  %v1439 = vld [vmem:[%s1438] sm:$0xff]
  %v1440 = vld [vmem:[%s1438 + $0x8] sm:$0xff]
  %v1441 = vld [vmem:[%s1438 + $0x10] sm:$0xff]
  %v1442 = vld [vmem:[%s1438 + $0x18] sm:$0xff]
  %v1443 = vld [vmem:[%s1438 + $0x20] sm:$0xff]
  %v1444 = vld [vmem:[%s1438 + $0x28] sm:$0xff]
  %v1445 = vld [vmem:[%s1438 + $0x30] sm:$0xff]
  %v1446 = vld [vmem:[%s1438 + $0x38] sm:$0xff]
  %v1447 = vld [vmem:[%s1438 + $0x40] sm:$0xff]
  %v1448 = vld [vmem:[%s1438 + $0x48] sm:$0xff]
  %v1449 = vld [vmem:[%s1438 + $0x50] sm:$0xff]
  %v1450 = vld [vmem:[%s1438 + $0x58] sm:$0xff]
  %v1451 = vld [vmem:[%s1438 + $0x60] sm:$0xff]
  %v1452 = vld [vmem:[%s1438 + $0x68] sm:$0xff]
  %v1453 = vld [vmem:[%s1438 + $0x70] sm:$0xff]
  %v1454 = vld [vmem:[%s1438 + $0x78] sm:$0xff]
  %v1455 = vld [vmem:[%s1438 + $0x80] sm:$0xff]
  %v1456 = vld [vmem:[%s1438 + $0x88] sm:$0xff]
  %v1457 = vld [vmem:[%s1438 + $0x90] sm:$0xff]
  %v1458 = vld [vmem:[%s1438 + $0x98] sm:$0xff]
  %v1459 = vld [vmem:[%s1438 + $0xa0] sm:$0xff]
  %v1460 = vld [vmem:[%s1438 + $0xa8] sm:$0x11]
  %v1483 = vunpack.c.l.b16 %v1439
  %v1484 = vunpack.c.h.b16 %v1439
  %v1485 = vunpack.c.l.b16 %v1440
  %v1486 = vunpack.c.h.b16 %v1440
  %v1487 = vunpack.c.l.b16 %v1441
  %v1488 = vunpack.c.h.b16 %v1441
  %v1489 = vunpack.c.l.b16 %v1442
  %v1490 = vunpack.c.h.b16 %v1442
  %v1491 = vunpack.c.l.b16 %v1443
  %v1492 = vunpack.c.h.b16 %v1443
  %v1493 = vunpack.c.l.b16 %v1444
  %v1494 = vunpack.c.h.b16 %v1444
  %v1495 = vunpack.c.l.b16 %v1445
  %v1496 = vunpack.c.h.b16 %v1445
  %v1497 = vunpack.c.l.b16 %v1446
  %v1498 = vunpack.c.h.b16 %v1446
  %v1499 = vunpack.c.l.b16 %v1447
  %v1500 = vunpack.c.h.b16 %v1447
  %v1501 = vunpack.c.l.b16 %v1448
  %v1502 = vunpack.c.h.b16 %v1448
  %v1503 = vunpack.c.l.b16 %v1449
  %v1504 = vunpack.c.h.b16 %v1449
  %v1505 = vunpack.c.l.b16 %v1450
  %v1506 = vunpack.c.h.b16 %v1450
  %v1507 = vunpack.c.l.b16 %v1451
  %v1508 = vunpack.c.h.b16 %v1451
  %v1509 = vunpack.c.l.b16 %v1452
  %v1510 = vunpack.c.h.b16 %v1452
  %v1511 = vunpack.c.l.b16 %v1453
  %v1512 = vunpack.c.h.b16 %v1453
  %v1513 = vunpack.c.l.b16 %v1454
  %v1514 = vunpack.c.h.b16 %v1454
  %v1515 = vunpack.c.l.b16 %v1455
  %v1516 = vunpack.c.h.b16 %v1455
  %v1517 = vunpack.c.l.b16 %v1456
  %v1518 = vunpack.c.h.b16 %v1456
  %v1519 = vunpack.c.l.b16 %v1457
  %v1520 = vunpack.c.h.b16 %v1457
  %v1521 = vunpack.c.l.b16 %v1458
  %v1522 = vunpack.c.h.b16 %v1458
  %v1523 = vunpack.c.l.b16 %v1459
  %v1524 = vunpack.c.h.b16 %v1459
  %v1525 = vunpack.c.l.b16 %v1460
  %v1526 = vunpack.c.h.b16 %v1460
  %v1527 = vpack.c.b16 %v1485, %v1483
  %v1528 = vpack.c.b16 %v1486, %v1484
  %v1529 = vpack.c.b16 %v1489, %v1487
  %v1530 = vpack.c.b16 %v1490, %v1488
  %v1531 = vpack.c.b16 %v1493, %v1491
  %v1532 = vpack.c.b16 %v1494, %v1492
  %v1533 = vpack.c.b16 %v1497, %v1495
  %v1534 = vpack.c.b16 %v1498, %v1496
  %v1535 = vpack.c.b16 %v1501, %v1499
  %v1536 = vpack.c.b16 %v1502, %v1500
  %v1537 = vpack.c.b16 %v1505, %v1503
  %v1538 = vpack.c.b16 %v1506, %v1504
  %v1539 = vpack.c.b16 %v1509, %v1507
  %v1540 = vpack.c.b16 %v1510, %v1508
  %v1541 = vpack.c.b16 %v1513, %v1511
  %v1542 = vpack.c.b16 %v1514, %v1512
  %v1543 = vpack.c.b16 %v1517, %v1515
  %v1544 = vpack.c.b16 %v1518, %v1516
  %v1545 = vpack.c.b16 %v1521, %v1519
  %v1546 = vpack.c.b16 %v1522, %v1520
  %v1547 = vpack.c.b16 %v1525, %v1523
  %v1548 = vpack.c.b16 %v1526, %v1524
  %vm1569 = vcmask 334848
  %v1571 = vsel %vm1569, %v1437, 0
  %vm1573 = vcmask 1043456
  %vm1574 = vcmask 1044480
  %v1575 = vsel %vm1573, 4294967295, 65535
  %v1576 = vsel %vm1574, %v1575, 0
  %v1578 = vand.u32 %v1547, %v1576
  %v1581 = vand.u32 %v1548, %v1576
  %1583 = vmatpush.bf16.msra.mxu0 %v1541
  %1584 = vmatpush.bf16.msra.mxu0 %v1539
  %1585 = vmatpush.bf16.msra.mxu0 %v1537
  %1586 = vmatpush.bf16.msra.mxu0 %v1535
  %1587 = vmatpush.bf16.msra.mxu0 %v1533
  %1588 = vmatpush.bf16.msra.mxu0 %v1531
  %1589 = vmatpush.bf16.msra.mxu0 %v1529
  %1590 = vmatpush.bf16.msra.mxu0 %v1527
  %1591 = vmatmul.bf16.gmra.mxu0 %v1436
  %v1592 = vpop.f32.mrf.mxu0
  %v1593 = vadd.f32 0.0, %v1592
  %v1594 = vpop.f32.mrf.mxu0
  %1595 = vdwg.mxu0
  %1596 = vmatpush.bf16.msra.mxu0 0
  %1597 = vmatpush.bf16.msra.mxu0 0
  %1598 = vmatpush.bf16.msra.mxu0 0
  %1599 = vmatpush.bf16.msra.mxu0 0
  %1600 = vmatpush.bf16.msra.mxu0 0
  %1601 = vmatpush.bf16.msra.mxu0 %v1578
  %1602 = vmatpush.bf16.msra.mxu0 %v1545
  %1603 = vmatpush.bf16.msra.mxu0 %v1543
  %1604 = vmatmul.bf16.gmra.mxu0 %v1571
  %v1605 = vpop.f32.mrf.mxu0
  %v1606 = vadd.f32 %v1593, %v1605
  %v1607 = vpop.f32.mrf.mxu0
  %1608 = vdwg.mxu0
  %1609 = vmatpush.bf16.msra.mxu0 %v1542
  %1610 = vmatpush.bf16.msra.mxu0 %v1540
  %1611 = vmatpush.bf16.msra.mxu0 %v1538
  %1612 = vmatpush.bf16.msra.mxu0 %v1536
  %1613 = vmatpush.bf16.msra.mxu0 %v1534
  %1614 = vmatpush.bf16.msra.mxu0 %v1532
  %1615 = vmatpush.bf16.msra.mxu0 %v1530
  %1616 = vmatpush.bf16.msra.mxu0 %v1528
  %1617 = vmatmul.bf16.gmra.mxu0 %v1436
  %v1618 = vpop.f32.mrf.mxu0
  %v1619 = vadd.f32 0.0, %v1618
  %v1620 = vpop.f32.mrf.mxu0
  %1621 = vdwg.mxu0
  %1622 = vmatpush.bf16.msra.mxu0 0
  %1623 = vmatpush.bf16.msra.mxu0 0
  %1624 = vmatpush.bf16.msra.mxu0 0
  %1625 = vmatpush.bf16.msra.mxu0 0
  %1626 = vmatpush.bf16.msra.mxu0 0
  %1627 = vmatpush.bf16.msra.mxu0 %v1581
  %1628 = vmatpush.bf16.msra.mxu0 %v1546
  %1629 = vmatpush.bf16.msra.mxu0 %v1544
  %1630 = vmatmul.bf16.gmra.mxu0 %v1571
  %v1631 = vpop.f32.mrf.mxu0
  %v1632 = vadd.f32 %v1619, %v1631
  %v1633 = vpop.f32.mrf.mxu0
  %1634 = vdwg.mxu0
  %v1657 = vunpack.c.l.b16 %v1412
  %v1658 = vunpack.c.h.b16 %v1412
  %v1659 = vunpack.c.l.b16 %v1413
  %v1660 = vunpack.c.h.b16 %v1413
  %v1661 = vunpack.c.l.b16 %v1414
  %v1662 = vunpack.c.h.b16 %v1414
  %v1663 = vunpack.c.l.b16 %v1415
  %v1664 = vunpack.c.h.b16 %v1415
  %v1665 = vunpack.c.l.b16 %v1416
  %v1666 = vunpack.c.h.b16 %v1416
  %v1667 = vunpack.c.l.b16 %v1417
  %v1668 = vunpack.c.h.b16 %v1417
  %v1669 = vunpack.c.l.b16 %v1418
  %v1670 = vunpack.c.h.b16 %v1418
  %v1671 = vunpack.c.l.b16 %v1419
  %v1672 = vunpack.c.h.b16 %v1419
  %v1673 = vunpack.c.l.b16 %v1420
  %v1674 = vunpack.c.h.b16 %v1420
  %v1675 = vunpack.c.l.b16 %v1421
  %v1676 = vunpack.c.h.b16 %v1421
  %v1677 = vunpack.c.l.b16 %v1422
  %v1678 = vunpack.c.h.b16 %v1422
  %v1679 = vunpack.c.l.b16 %v1423
  %v1680 = vunpack.c.h.b16 %v1423
  %v1681 = vunpack.c.l.b16 %v1424
  %v1682 = vunpack.c.h.b16 %v1424
  %v1683 = vunpack.c.l.b16 %v1425
  %v1684 = vunpack.c.h.b16 %v1425
  %v1685 = vunpack.c.l.b16 %v1426
  %v1686 = vunpack.c.h.b16 %v1426
  %v1687 = vunpack.c.l.b16 %v1427
  %v1688 = vunpack.c.h.b16 %v1427
  %v1689 = vunpack.c.l.b16 %v1428
  %v1690 = vunpack.c.h.b16 %v1428
  %v1691 = vunpack.c.l.b16 %v1429
  %v1692 = vunpack.c.h.b16 %v1429
  %v1693 = vunpack.c.l.b16 %v1430
  %v1694 = vunpack.c.h.b16 %v1430
  %v1695 = vunpack.c.l.b16 %v1431
  %v1696 = vunpack.c.h.b16 %v1431
  %v1697 = vunpack.c.l.b16 %v1432
  %v1698 = vunpack.c.h.b16 %v1432
  %v1699 = vunpack.c.l.b16 %v1433
  %v1700 = vunpack.c.h.b16 %v1433
  %v1701 = vpack.c.b16 %v1659, %v1657
  %v1702 = vpack.c.b16 %v1660, %v1658
  %v1703 = vpack.c.b16 %v1663, %v1661
  %v1704 = vpack.c.b16 %v1664, %v1662
  %v1705 = vpack.c.b16 %v1667, %v1665
  %v1706 = vpack.c.b16 %v1668, %v1666
  %v1707 = vpack.c.b16 %v1671, %v1669
  %v1708 = vpack.c.b16 %v1672, %v1670
  %v1709 = vpack.c.b16 %v1675, %v1673
  %v1710 = vpack.c.b16 %v1676, %v1674
  %v1711 = vpack.c.b16 %v1679, %v1677
  %v1712 = vpack.c.b16 %v1680, %v1678
  %v1713 = vpack.c.b16 %v1683, %v1681
  %v1714 = vpack.c.b16 %v1684, %v1682
  %v1715 = vpack.c.b16 %v1687, %v1685
  %v1716 = vpack.c.b16 %v1688, %v1686
  %v1717 = vpack.c.b16 %v1691, %v1689
  %v1718 = vpack.c.b16 %v1692, %v1690
  %v1719 = vpack.c.b16 %v1695, %v1693
  %v1720 = vpack.c.b16 %v1696, %v1694
  %v1721 = vpack.c.b16 %v1699, %v1697
  %v1722 = vpack.c.b16 %v1700, %v1698
  %v1744 = vsel %vm1569, %v1411, 0
  %v1747 = vand.u32 %v1721, %v1576
  %v1750 = vand.u32 %v1722, %v1576
  %1752 = vmatpush.bf16.msra.mxu0 %v1715
  %1753 = vmatpush.bf16.msra.mxu0 %v1713
  %1754 = vmatpush.bf16.msra.mxu0 %v1711
  %1755 = vmatpush.bf16.msra.mxu0 %v1709
  %1756 = vmatpush.bf16.msra.mxu0 %v1707
  %1757 = vmatpush.bf16.msra.mxu0 %v1705
  %1758 = vmatpush.bf16.msra.mxu0 %v1703
  %1759 = vmatpush.bf16.msra.mxu0 %v1701
  %1760 = vmatmul.bf16.gmra.mxu0 %v1410
  %v1761 = vpop.f32.mrf.mxu0
  %v1762 = vadd.f32 %v1606, %v1761
  %v1763 = vpop.f32.mrf.mxu0
  %1764 = vdwg.mxu0
  %1765 = vmatpush.bf16.msra.mxu0 0
  %1766 = vmatpush.bf16.msra.mxu0 0
  %1767 = vmatpush.bf16.msra.mxu0 0
  %1768 = vmatpush.bf16.msra.mxu0 0
  %1769 = vmatpush.bf16.msra.mxu0 0
  %1770 = vmatpush.bf16.msra.mxu0 %v1747
  %1771 = vmatpush.bf16.msra.mxu0 %v1719
  %1772 = vmatpush.bf16.msra.mxu0 %v1717
  %1773 = vmatmul.bf16.gmra.mxu0 %v1744
  %v1774 = vpop.f32.mrf.mxu0
  %v1775 = vadd.f32 %v1762, %v1774
  %v1776 = vpop.f32.mrf.mxu0
  %1777 = vdwg.mxu0
  %1778 = vmatpush.bf16.msra.mxu0 %v1716
  %1779 = vmatpush.bf16.msra.mxu0 %v1714
  %1780 = vmatpush.bf16.msra.mxu0 %v1712
  %1781 = vmatpush.bf16.msra.mxu0 %v1710
  %1782 = vmatpush.bf16.msra.mxu0 %v1708
  %1783 = vmatpush.bf16.msra.mxu0 %v1706
  %1784 = vmatpush.bf16.msra.mxu0 %v1704
  %1785 = vmatpush.bf16.msra.mxu0 %v1702
  %1786 = vmatmul.bf16.gmra.mxu0 %v1410
  %v1787 = vpop.f32.mrf.mxu0
  %v1788 = vadd.f32 %v1632, %v1787
  %v1789 = vpop.f32.mrf.mxu0
  %1790 = vdwg.mxu0
  %1791 = vmatpush.bf16.msra.mxu0 0
  %1792 = vmatpush.bf16.msra.mxu0 0
  %1793 = vmatpush.bf16.msra.mxu0 0
  %1794 = vmatpush.bf16.msra.mxu0 0
  %1795 = vmatpush.bf16.msra.mxu0 0
  %1796 = vmatpush.bf16.msra.mxu0 %v1750
  %1797 = vmatpush.bf16.msra.mxu0 %v1720
  %1798 = vmatpush.bf16.msra.mxu0 %v1718
  %1799 = vmatmul.bf16.gmra.mxu0 %v1744
  %v1800 = vpop.f32.mrf.mxu0
  %v1801 = vadd.f32 %v1788, %v1800
  %v1802 = vpop.f32.mrf.mxu0
  %1803 = vdwg.mxu0
  %v1804 = vld [vmem:[%s4] sm:$0x3]
  %v1806 = vperm.slane %v1804, 0
  %v1807 = vperm.slane %v1804, 1
  %v1810 = vadd.f32 %v1775, %v1806
  %v1811 = vadd.f32 %v1801, %v1807
  %v1812 = vmax.f32 %v1810, %v1811
  %1813 = vmax.xlane.f32.xlu0 %v1812
  %v1814 = vpop.xlane.xlu0 %1813
  %v1815 = vsub.f32 %v1810, %v1814
  %v1816 = vsub.f32 %v1811, %v1814
  %v1817 = vmul.f32 %v1815, 1.442695
  %v1818 = vpow.pop %v1817
  %v1819 = vmul.f32 %v1816, 1.442695
  %v1820 = vpow.pop %v1819
  %v1821 = vadd.f32 %v1818, %v1820
  %1822 = vadd.xlane.f32.xlu0 %v1821
  %v1823 = vpop.xlane.xlu0 %1822
  %v1824 = vrcp.pop %v1823
  %v1825 = vmul.f32 %v1818, %v1824
  %v1826 = vmul.f32 %v1820, %v1824
  %1827 = vst [vmem:[%s5] sm:$0xff] %v1825
  %1828 = vst [vmem:[%s5 + $0x8] sm:$0xff] %v1826
  // Predicated region
  $region22: #{policy_head_forward.1} parent=0 // pred_check
    _
  $region23: #{policy_head_forward.1} parent=0 // pred_check_branch
    %1830 = sbr.rel (0) target = $region25
  $region24: #{policy_head_forward.1} parent=0 // pred_region
    _
  $region25: #{policy_head_forward.1} parent=0 // pred_fallthru
    _
  // Predicated region
  $region26: #{policy_head_forward.1} parent=0 // pred_check
    _
  $region27: #{policy_head_forward.1} parent=0 // pred_check_branch
    %1832 = sbr.rel (0) target = $region29
  $region28: #{policy_head_forward.1} parent=0 // pred_region
    _
  $region29: #{policy_head_forward.1} parent=0 // pred_fallthru
    _

</llo_original>
